<compile_context>
chip_gen: v5e
topology: v5e:2x2
jax: 0.10.0
libtpu: 0.0.40
codegen_flags: <defaults>
</compile_context>

<pallas_src>
import jax
import jax.numpy as jnp
from jax import lax
from jax.experimental import pallas as pl
from jax.experimental.pallas import tpu as pltpu

NUM_CLASSES = 3
SEP_ID = 2
_EPS = 1e-5  # PyTorch LayerNorm default eps
_LANE = 128


def _round_up(x, m):
    return ((x + m - 1) // m) * m


def _layer_norm(x, gamma, beta):
    # var = E[x^2] - mu^2: two independent cross-lane reductions instead of the
    # serial reduce -> subtract -> square -> reduce chain.
    mu = jnp.mean(x, axis=-1, keepdims=True)
    ms = jnp.mean(x * x, axis=-1, keepdims=True)
    var = ms - mu * mu
    return (x - mu) * lax.rsqrt(var + _EPS) * gamma + beta


def _vmem_limit_bytes():
    # ~48 MiB on v7x (64 MiB physical/TC, leave headroom for Mosaic internal
    # scratch / semaphores), capped at 100 MiB on v5e/v6e (128 MiB physical).
    try:
        cap = int(pltpu.get_tpu_info().vmem_capacity_bytes)
    except Exception:
        cap = 128 * 1024 * 1024
    return max(32 * 1024 * 1024, min(cap - 16 * 1024 * 1024, 100 * 1024 * 1024))


# ---------------------------------------------------------------------------
# Main kernel: grid = (batch_block, phase, seq_tile).
#   phase 0: masked max pool of the B-factor-weighted embeddings -> pooled_sc.
#   phase 1: FiLM (LayerNorm + chem proj + fused film linear) + final max pool.
# ---------------------------------------------------------------------------
def film_pool_kernel(x_ref, scal_ref, pslab_ref, chem1_ref, cw2_ref,
                     fwx_ref, fwz_ref, fb_ref, out_ref, pooled_sc):
    f32 = jnp.float32
    phase = pl.program_id(1)
    s = pl.program_id(2)
    B_BLK, S_TILE, H = x_ref.shape
    N = B_BLK * S_TILE
    neg_inf = jnp.float32(-jnp.inf)
    mm = cw2_ref.dtype                       # MXU compute dtype (bf16 or f32)

    x3 = x_ref[...]                          # (B_BLK, S_TILE, H) f32
    scal = scal_ref[...]                     # (B_BLK, S_TILE, 8)
    mask3 = scal[..., 6:7]                   # combined attention mask
    w_eff3 = scal[..., 7:8]                  # rw on receptor positions, else 1
    keep = mask3 > 0.5                       # shared by both masked max-pools
    xw3 = x3 * w_eff3                        # B-factor weighted embeddings

    # ---- phase 0: masked max pool over sequence tiles -> pooled context -----
    @pl.when(phase == 0)
    def _():
        @pl.when(s == 0)
        def _():
            pooled_sc[...] = jnp.full(pooled_sc.shape, neg_inf, f32)

        tile_pool = jnp.max(jnp.where(keep, xw3, neg_inf),
                            axis=1, keepdims=True)            # (B_BLK, 1, H)
        pooled_sc[...] = jnp.maximum(pooled_sc[...], tile_pool)

    # ---- phase 1: FiLM + final masked max pool ------------------------------
    @pl.when(phase == 1)
    def _():
        ps = pslab_ref[...]                  # (8, H) packed (1,H) params
        lnx_g, lnx_b = ps[0:1, :], ps[1:2, :]
        cb2, cln_g, cln_b = ps[2:3, :], ps[3:4, :], ps[4:5, :]
        c1 = chem1_ref[...]                  # (4, 64): rows 0..2 = W1, row 3 = b1
        w1, b1 = c1[0:3, :], c1[3:4, :]
        cw2 = cw2_ref[...]                   # (64, H)

        xw2 = xw3.reshape(N, H)
        x_ln = _layer_norm(xw2, lnx_g, lnx_b)
        chem2 = scal[..., 0:6].reshape(N, 6)  # receptor channels pre-weighted

        def chem_proj(c):                    # K=3 first linear as broadcast-sum
            h = (c[:, 0:1] * w1[0:1, :] + c[:, 1:2] * w1[1:2, :]
                 + c[:, 2:3] * w1[2:3, :] + b1)
            h = jnp.maximum(h, 0.0)
            o = jnp.dot(h.astype(mm), cw2, preferred_element_type=f32) + cb2
            return _layer_norm(o, cln_g, cln_b)

        # Two sequential (N,64)@(64,H) dots; no (2N,64)/(2N,H) temporaries.
        z2 = chem_proj(chem2[:, 0:3]) + chem_proj(chem2[:, 3:6])
        z2 = (z2.reshape(B_BLK, S_TILE, H) + pooled_sc[...]).reshape(N, H)

        # Fused FiLM linear: two N=2H matmuls instead of four N=H matmuls.
        gb = (jnp.dot(x_ln.astype(mm), fwx_ref[...], preferred_element_type=f32)
              + jnp.dot(z2.astype(mm), fwz_ref[...], preferred_element_type=f32)
              + fb_ref[...])                                   # (N, 2H)
        gamma, beta = gb[:, :H], gb[:, H:]
        cond = gamma * x_ln + beta           # dropout(0.1) = identity (inference)

        tile_max = jnp.max(jnp.where(keep, cond.reshape(B_BLK, S_TILE, H),
                                     neg_inf),
                           axis=1, keepdims=True)              # (B_BLK, 1, H)

        @pl.when(s == 0)
        def _():
            out_ref[...] = tile_max

        @pl.when(s != 0)
        def _():
            out_ref[...] = jnp.maximum(out_ref[...], tile_max)


# ---------------------------------------------------------------------------
# Classifier head (whole (B, H) batch at once; lane-padded logits).
# ---------------------------------------------------------------------------
def classifier_kernel(final_ref, w1_ref, b1_ref, g_ref, b_ref, w2_ref, b2_ref,
                      out_ref):
    f32 = jnp.float32
    final = final_ref[...]                                           # (B, H)
    h = jnp.dot(final.astype(w1_ref.dtype), w1_ref[...],
                preferred_element_type=f32) + b1_ref[...]
    h = jnp.maximum(_layer_norm(h, g_ref[...], b_ref[...]), 0.0)     # dropout=id
    out_ref[...] = (jnp.dot(h.astype(w2_ref.dtype), w2_ref[...],
                            preferred_element_type=f32) + b2_ref[...])


# ---------------------------------------------------------------------------
# Wrapper
# ---------------------------------------------------------------------------
def esm_bfactor_forward(sequence_output, combined_mask, receptor_mask,
                        receptor_weights, chem_features, params,
                        *, mm_dtype=jnp.bfloat16, max_s_tile=512):
    B, S, H = sequence_output.shape
    f32 = jnp.float32

    # ---- choose sequence tile / batch block ---------------------------------
    n_s = -(-S // max_s_tile)
    S_TILE = _round_up(-(-S // n_s), 8)
    S_pad = S_TILE * n_s
    if n_s == 1:
        B_BLK = 1
        for d in range(1, B + 1):            # largest divisor of B under budget
            if B % d == 0 and d * S_pad * H * 4 <= 2 * 1024 * 1024:
                B_BLK = d
    else:
        B_BLK = 1
    n_b = B // B_BLK

    # ---- pad the sequence axis to a multiple of the tile --------------------
    x = sequence_output.astype(f32)
    cm, rmask, rw, chem = combined_mask, receptor_mask, receptor_weights, chem_features
    if S_pad != S:
        pad = S_pad - S
        x = jnp.pad(x, ((0, 0), (0, pad), (0, 0)))
        cm = jnp.pad(cm, ((0, 0), (0, pad)))
        rmask = jnp.pad(rmask, ((0, 0), (0, pad)))
        rw = jnp.pad(rw.astype(f32), ((0, 0), (0, pad)), constant_values=1.0)
        chem = jnp.pad(chem, ((0, 0), (0, pad), (0, 0)))

    # ---- pack per-position scalars; pre-weight receptor chem channels -------
    maskc = cm.astype(f32)[..., None]                               # (B,Sp,1)
    w_eff = jnp.where(rmask.astype(bool), rw.astype(f32), 1.0)[..., None]
    is_rec = ((jnp.arange(6) % 2) == 1)[None, None, :]
    chemf = chem.astype(f32)
    chem_w = jnp.where(is_rec, chemf * w_eff, chemf)
    scal = jnp.concatenate([chem_w, maskc, w_eff], axis=-1)         # (B,Sp,8)

    # ---- one-time weight prep ------------------------------------------------
    film_w = params["film_w"].astype(f32)                           # (2H, 2H)
    fw_x = film_w[:H, :].astype(mm_dtype)                           # (H, 2H)
    fw_z = film_w[H:, :].astype(mm_dtype)
    film_b = params["film_b"].astype(f32)                           # (1, 2H)
    pslab = jnp.concatenate(
        [params["lnx_g"], params["lnx_b"], params["cb2"],
         params["cln_g"], params["cln_b"], jnp.zeros((3, H), f32)],
        axis=0).astype(f32)                                         # (8, H)
    chem1 = jnp.concatenate([params["cw1"], params["cb1"]],
                            axis=0).astype(f32)                     # (4, 64)
    seq_params = [pslab, chem1, params["cw2"].astype(mm_dtype),
                  fw_x, fw_z, film_b]

    # ---- main fused kernel ---------------------------------------------------
    grid = (n_b, 2, n_s)
    x_spec = pl.BlockSpec((B_BLK, S_TILE, H), lambda b, p, s: (b, s, 0))
    scal_spec = pl.BlockSpec((B_BLK, S_TILE, 8), lambda b, p, s: (b, s, 0))
    out_spec = pl.BlockSpec((B_BLK, 1, H), lambda b, p, s: (b, 0, 0))

    def call(single_buffer_params):
        in_specs = [x_spec, scal_spec]
        for prm in seq_params:
            zmap = (lambda nd: (lambda b, p, s: (0,) * nd))(prm.ndim)
            if single_buffer_params:
                in_specs.append(pl.BlockSpec(prm.shape, zmap,
                                             pipeline_mode=pl.Buffered(1)))
            else:
                in_specs.append(pl.BlockSpec(prm.shape, zmap))
        return pl.pallas_call(
            film_pool_kernel,
            out_shape=jax.ShapeDtypeStruct((B, 1, H), f32),
            grid_spec=pltpu.PrefetchScalarGridSpec(
                num_scalar_prefetch=0, grid=grid,
                in_specs=in_specs, out_specs=out_spec,
                scratch_shapes=[pltpu.VMEM((B_BLK, 1, H), f32)]),
            compiler_params=pltpu.CompilerParams(
                dimension_semantics=("parallel", "arbitrary", "arbitrary"),
                vmem_limit_bytes=_vmem_limit_bytes()),
        )(x, scal, *seq_params)

    try:
        final = call(True)      # grid-invariant params: single-buffered
    except Exception:
        # TODO(synk): pipeline_mode=pl.Buffered(1) unsupported on this jax
        #             version; fall back to default double-buffered params.
        final = call(False)

    # ---- classifier head (lane-padded last linear) ---------------------------
    w2p = jnp.zeros((H // 2, _LANE), f32).at[:, :NUM_CLASSES].set(
        params["clf_w2"].astype(f32)).astype(mm_dtype)
    b2p = jnp.zeros((1, _LANE), f32).at[:, :NUM_CLASSES].set(
        params["clf_b2"].astype(f32))
    logits = pl.pallas_call(
        classifier_kernel,
        out_shape=jax.ShapeDtypeStruct((B, _LANE), jnp.float32),
    )(final.reshape(B, H),
      params["clf_w1"].astype(mm_dtype), params["clf_b1"].astype(f32),
      params["clf_ln_g"].astype(f32), params["clf_ln_b"].astype(f32),
      w2p, b2p)
    return logits[:, :NUM_CLASSES]


# ---------------------------------------------------------------------------
# Pure-JAX reference of the same math (for correctness check only).
# `mm_dtype` applies the same matmul-input casts as the kernel path.
# ---------------------------------------------------------------------------
def reference_forward(seq_out, mask, rmask, rw, chem, p, *, mm_dtype=jnp.float32):
    f32 = jnp.float32
    maskb = mask.astype(bool)
    H = seq_out.shape[-1]
    w_eff = jnp.where(rmask.astype(bool), rw.astype(f32), 1.0)[..., None]

    def ln(x, g, b):
        mu = jnp.mean(x, axis=-1, keepdims=True)
        var = jnp.mean(jnp.square(x - mu), axis=-1, keepdims=True)
        return (x - mu) * lax.rsqrt(var + _EPS) * g + b

    def mm(a, w):
        return jnp.matmul(a.astype(mm_dtype), w.astype(mm_dtype),
                          preferred_element_type=f32)

    xw = seq_out.astype(f32) * w_eff
    pooled = jnp.max(jnp.where(maskb[..., None], xw, -jnp.inf), axis=1)   # (B,H)
    x_ln = ln(xw, p["lnx_g"][0], p["lnx_b"][0])

    is_rec = (jnp.arange(6) % 2) == 1
    chemf = chem.astype(f32)
    chem_w = jnp.where(is_rec[None, None, :], chemf * w_eff, chemf)

    def cp(c):
        h = jnp.maximum(c @ p["cw1"] + p["cb1"][0], 0.0)
        o = mm(h, p["cw2"]) + p["cb2"][0]
        return ln(o, p["cln_g"][0], p["cln_b"][0])

    z = pooled[:, None, :] + cp(chem_w[..., 0:3]) + cp(chem_w[..., 3:6])
    combined = jnp.concatenate([x_ln, z], axis=-1)
    gb = mm(combined, p["film_w"]) + p["film_b"][0]
    gamma, beta = gb[..., :H], gb[..., H:]
    cond = gamma * x_ln + beta
    final = jnp.max(jnp.where(maskb[..., None], cond, -jnp.inf), axis=1)
    h = mm(final, p["clf_w1"]) + p["clf_b1"][0]
    h = jnp.maximum(ln(h, p["clf_ln_g"][0], p["clf_ln_b"][0]), 0.0)
    return mm(h, p["clf_w2"]) + p["clf_b2"][0]


def init_params(key, H, num_classes=NUM_CLASSES):
    ks = jax.random.split(key, 12)

    def lin(k, fi, fo):
        return jax.random.normal(k, (fi, fo), jnp.float32) / jnp.sqrt(float(fi))

    def bias(k, fo):
        return 0.01 * jax.random.normal(k, (1, fo), jnp.float32)

    return {
        "lnx_g": jnp.ones((1, H), jnp.float32),
        "lnx_b": jnp.zeros((1, H), jnp.float32),
        "cw1": lin(ks[0], 3, 64), "cb1": bias(ks[1], 64),
        "cw2": lin(ks[2], 64, H), "cb2": bias(ks[3], H),
        "cln_g": jnp.ones((1, H), jnp.float32),
        "cln_b": jnp.zeros((1, H), jnp.float32),
        "film_w": lin(ks[4], 2 * H, 2 * H), "film_b": bias(ks[5], 2 * H),
        "clf_w1": lin(ks[6], H, H // 2), "clf_b1": bias(ks[7], H // 2),
        "clf_ln_g": jnp.ones((1, H // 2), jnp.float32),
        "clf_ln_b": jnp.zeros((1, H // 2), jnp.float32),
        "clf_w2": lin(ks[8], H // 2, num_classes), "clf_b2": bias(ks[9], num_classes),
    }


if __name__ == "__main__":
    B, S, H = 2, 8, 32

    key = jax.random.PRNGKey(0)
    k_seq, k_tok, k_w, k_chem_s, k_chem_r, k_param = jax.random.split(key, 6)

    # Synthetic ESM2 last_hidden_state (backbone itself is not re-implemented).
    sequence_output = jax.random.normal(k_seq, (B, S, H), jnp.float32)

    # Tokens with exactly one separator (EOS) per row; row 1 has one padded pos.
    tokens = jax.random.randint(k_tok, (B, S), 4, 24)
    sep_pos = jnp.array([3, 4], dtype=jnp.int32)
    tokens = tokens.at[jnp.arange(B), sep_pos].set(SEP_ID)
    combined_mask = jnp.ones((B, S), jnp.int32).at[1, S - 1].set(0)

    # Synthetic B-factor weights in [0.5, 2.0] (stand-in for BFactorWeightGenerator).
    receptor_weights = jax.random.uniform(k_w, (B, S), jnp.float32,
                                          minval=0.5, maxval=2.0)

    # Chemical features: [seq_bulk, rec_bulk, seq_charge, rec_charge, seq_hydro, rec_hydro]
    seq_feats = jax.random.normal(k_chem_s, (B, S, 3), jnp.float32)
    rec_feats = jax.random.normal(k_chem_r, (B, S, 3), jnp.float32)
    chem_features = jnp.stack(
        [seq_feats[..., 0], rec_feats[..., 0],
         seq_feats[..., 1], rec_feats[..., 1],
         seq_feats[..., 2], rec_feats[..., 2]], axis=-1)

    # Receptor mask: positions strictly after the (first) separator token.
    sep_hits = tokens == SEP_ID
    first_sep = jnp.argmax(sep_hits.astype(jnp.int32), axis=1)
    has_sep = jnp.any(sep_hits, axis=1)
    pos = jnp.arange(S)[None, :]
    receptor_mask = ((pos > first_sep[:, None])
                     & has_sep[:, None]
                     & (first_sep[:, None] < S - 1))

    params = init_params(k_param, H)

    # --- f32 MXU path (tight tolerance) ---------------------------------------
    logits_f32 = esm_bfactor_forward(sequence_output, combined_mask,
                                     receptor_mask, receptor_weights,
                                     chem_features, params,
                                     mm_dtype=jnp.float32)
    logits_f32 = jax.block_until_ready(logits_f32)
    ref_f32 = reference_forward(sequence_output, combined_mask, receptor_mask,
                                receptor_weights, chem_features, params,
                                mm_dtype=jnp.float32)
    assert logits_f32.shape == (B, NUM_CLASSES)
    assert jnp.allclose(logits_f32, ref_f32, atol=1e-3, rtol=1e-3), (
        logits_f32, ref_f32)

    # --- default bf16 MXU path (f32 accumulation, f32 element-wise math) ------
    logits = esm_bfactor_forward(sequence_output, combined_mask, receptor_mask,
                                 receptor_weights, chem_features, params)
    logits = jax.block_until_ready(logits)
    ref_bf16 = reference_forward(sequence_output, combined_mask, receptor_mask,
                                 receptor_weights, chem_features, params,
                                 mm_dtype=jnp.bfloat16)
    assert logits.shape == (B, NUM_CLASSES)
    assert jnp.allclose(logits, ref_bf16, atol=2e-2, rtol=2e-2), (
        logits, ref_bf16)

    print("KERNEL_OK")
</pallas_src>

<mosaic_0001>
module attributes {stable_mosaic.version = 11 : i64} {
  func.func @film_pool_kernel(%arg0: i32, %arg1: i32, %arg2: i32, %arg3: memref<2x8x32xf32, #tpu.memory_space<vmem>>, %arg4: memref<2x8x8xf32, #tpu.memory_space<vmem>>, %arg5: memref<8x32xf32, #tpu.memory_space<vmem>>, %arg6: memref<4x64xf32, #tpu.memory_space<vmem>>, %arg7: memref<64x32xf32, #tpu.memory_space<vmem>>, %arg8: memref<32x64xf32, #tpu.memory_space<vmem>>, %arg9: memref<32x64xf32, #tpu.memory_space<vmem>>, %arg10: memref<1x64xf32, #tpu.memory_space<vmem>>, %arg11: memref<2x1x32xf32, #tpu.memory_space<vmem>>, %arg12: memref<2x1x32xf32, #tpu.memory_space<vmem>>) attributes {dimension_semantics = [#tpu.dimension_semantics<parallel>, #tpu.dimension_semantics<arbitrary>, #tpu.dimension_semantics<arbitrary>], iteration_bounds = array<i64: 1, 2, 1>, scalar_prefetch = 0 : i64, scratch_operands = 1 : i64, tpu.core_type = #tpu.core_type<tc>, window_params = [{transform_indices = @transform_0, window_bounds = array<i64: 2, 8, 32>}, {transform_indices = @transform_1, window_bounds = array<i64: 2, 8, 8>}, {pipeline_mode = #tpu.pipeline_mode<synchronous>, transform_indices = @transform_2, window_bounds = array<i64: 8, 32>}, {pipeline_mode = #tpu.pipeline_mode<synchronous>, transform_indices = @transform_3, window_bounds = array<i64: 4, 64>}, {pipeline_mode = #tpu.pipeline_mode<synchronous>, transform_indices = @transform_4, window_bounds = array<i64: 64, 32>}, {pipeline_mode = #tpu.pipeline_mode<synchronous>, transform_indices = @transform_5, window_bounds = array<i64: 32, 64>}, {pipeline_mode = #tpu.pipeline_mode<synchronous>, transform_indices = @transform_6, window_bounds = array<i64: 32, 64>}, {pipeline_mode = #tpu.pipeline_mode<synchronous>, transform_indices = @transform_7, window_bounds = array<i64: 1, 64>}, {transform_indices = @transform_8, window_bounds = array<i64: 2, 1, 32>}]} {
    %c0 = arith.constant 0 : index
    %c0_0 = arith.constant 0 : index
    %c0_1 = arith.constant 0 : index
    %0 = vector.load %arg3[%c0, %c0_0, %c0_1] : memref<2x8x32xf32, #tpu.memory_space<vmem>>, vector<2x8x32xf32>
    %c0_2 = arith.constant 0 : index
    %c0_3 = arith.constant 0 : index
    %c0_4 = arith.constant 0 : index
    %1 = vector.load %arg4[%c0_2, %c0_3, %c0_4] : memref<2x8x8xf32, #tpu.memory_space<vmem>>, vector<2x8x8xf32>
    %2 = vector.extract_strided_slice %1 {offsets = [0, 0, 6], sizes = [2, 8, 1], strides = [1, 1, 1]} : vector<2x8x8xf32> to vector<2x8x1xf32>
    %3 = vector.extract_strided_slice %1 {offsets = [0, 0, 7], sizes = [2, 8, 1], strides = [1, 1, 1]} : vector<2x8x8xf32> to vector<2x8x1xf32>
    %cst = arith.constant 5.000000e-01 : f32
    %4 = vector.broadcast %cst : f32 to vector<2x8x1xf32>
    %5 = arith.cmpf ogt, %2, %4 : vector<2x8x1xf32>
    %6 = vector.broadcast %3 : vector<2x8x1xf32> to vector<2x8x32xf32>
    %7 = arith.mulf %0, %6 : vector<2x8x32xf32>
    %c0_i32 = arith.constant 0 : i32
    %8 = arith.cmpi eq, %arg1, %c0_i32 : i32
    %9 = arith.extui %8 : i1 to i32
    %cst_5 = arith.constant 0xFF800000 : f32
    %c0_i32_6 = arith.constant 0 : i32
    %10 = arith.cmpi ne, %9, %c0_i32_6 : i32
    scf.if %10 {
      %c0_i32_9 = arith.constant 0 : i32
      %14 = arith.cmpi eq, %arg2, %c0_i32_9 : i32
      %15 = arith.extui %14 : i1 to i32
      %c0_i32_10 = arith.constant 0 : i32
      %16 = arith.cmpi ne, %15, %c0_i32_10 : i32
      scf.if %16 {
        %26 = vector.broadcast %cst_5 : f32 to vector<2x1x32xf32>
        %c0_18 = arith.constant 0 : index
        %c0_19 = arith.constant 0 : index
        %c0_20 = arith.constant 0 : index
        %27 = vector.load %arg12[%c0_18, %c0_19, %c0_20] : memref<2x1x32xf32, #tpu.memory_space<vmem>>, vector<2x1x32xf32>
        tpu.vector_store %arg12[%c0_18, %c0_19, %c0_20], %26 {strides = array<i32>} : memref<2x1x32xf32, #tpu.memory_space<vmem>>, vector<2x1x32xf32>,
      } else {
      }
      %17 = vector.shape_cast %5 : vector<2x8x1xi1> to vector<2x8x1xi1>
      %18 = vector.broadcast %17 : vector<2x8x1xi1> to vector<2x8x32xi1>
      %19 = vector.broadcast %cst_5 : f32 to vector<2x8x32xf32>
      %20 = arith.select %18, %7, %19 : vector<2x8x32xi1>, vector<2x8x32xf32>
      %cst_11 = arith.constant dense<0xFF800000> : vector<2x32xf32>
      %21 = vector.multi_reduction <maximumf>, %20, %cst_11 [1] : vector<2x8x32xf32> to vector<2x32xf32>
      %22 = vector.shape_cast %21 : vector<2x32xf32> to vector<2x1x32xf32>
      %c0_12 = arith.constant 0 : index
      %c0_13 = arith.constant 0 : index
      %c0_14 = arith.constant 0 : index
      %23 = vector.load %arg12[%c0_12, %c0_13, %c0_14] : memref<2x1x32xf32, #tpu.memory_space<vmem>>, vector<2x1x32xf32>
      %24 = arith.maximumf %23, %22 : vector<2x1x32xf32>
      %c0_15 = arith.constant 0 : index
      %c0_16 = arith.constant 0 : index
      %c0_17 = arith.constant 0 : index
      %25 = vector.load %arg12[%c0_15, %c0_16, %c0_17] : memref<2x1x32xf32, #tpu.memory_space<vmem>>, vector<2x1x32xf32>
      tpu.vector_store %arg12[%c0_15, %c0_16, %c0_17], %24 {strides = array<i32>} : memref<2x1x32xf32, #tpu.memory_space<vmem>>, vector<2x1x32xf32>,
    } else {
    }
    %c1_i32 = arith.constant 1 : i32
    %11 = arith.cmpi eq, %arg1, %c1_i32 : i32
    %12 = arith.extui %11 : i1 to i32
    %cst_7 = arith.constant 0xFF800000 : f32
    %c0_i32_8 = arith.constant 0 : i32
    %13 = arith.cmpi ne, %12, %c0_i32_8 : i32
    scf.if %13 {
      %c0_9 = arith.constant 0 : index
      %c0_10 = arith.constant 0 : index
      %14 = vector.load %arg5[%c0_9, %c0_10] : memref<8x32xf32, #tpu.memory_space<vmem>>, vector<8x32xf32>
      %15 = vector.extract_strided_slice %14 {offsets = [0, 0], sizes = [1, 32], strides = [1, 1]} : vector<8x32xf32> to vector<1x32xf32>
      %16 = vector.extract_strided_slice %14 {offsets = [1, 0], sizes = [1, 32], strides = [1, 1]} : vector<8x32xf32> to vector<1x32xf32>
      %17 = vector.extract_strided_slice %14 {offsets = [2, 0], sizes = [1, 32], strides = [1, 1]} : vector<8x32xf32> to vector<1x32xf32>
      %18 = vector.extract_strided_slice %14 {offsets = [3, 0], sizes = [1, 32], strides = [1, 1]} : vector<8x32xf32> to vector<1x32xf32>
      %19 = vector.extract_strided_slice %14 {offsets = [4, 0], sizes = [1, 32], strides = [1, 1]} : vector<8x32xf32> to vector<1x32xf32>
      %c0_11 = arith.constant 0 : index
      %c0_12 = arith.constant 0 : index
      %20 = vector.load %arg6[%c0_11, %c0_12] : memref<4x64xf32, #tpu.memory_space<vmem>>, vector<4x64xf32>
      %21 = vector.extract_strided_slice %20 {offsets = [0, 0], sizes = [3, 64], strides = [1, 1]} : vector<4x64xf32> to vector<3x64xf32>
      %22 = vector.extract_strided_slice %20 {offsets = [3, 0], sizes = [1, 64], strides = [1, 1]} : vector<4x64xf32> to vector<1x64xf32>
      %c0_13 = arith.constant 0 : index
      %c0_14 = arith.constant 0 : index
      %23 = vector.load %arg7[%c0_13, %c0_14] : memref<64x32xf32, #tpu.memory_space<vmem>>, vector<64x32xf32>
      %24 = vector.shape_cast %7 : vector<2x8x32xf32> to vector<16x32xf32>
      %cst_15 = arith.constant dense<0.000000e+00> : vector<16xf32>
      %25 = vector.multi_reduction <add>, %24, %cst_15 [1] : vector<16x32xf32> to vector<16xf32>
      %26 = vector.shape_cast %25 : vector<16xf32> to vector<16x1xf32>
      %cst_16 = arith.constant 3.200000e+01 : f32
      %27 = vector.broadcast %cst_16 : f32 to vector<16x1xf32>
      %28 = arith.divf %26, %27 : vector<16x1xf32>
      %29 = arith.mulf %24, %24 : vector<16x32xf32>
      %cst_17 = arith.constant dense<0.000000e+00> : vector<16xf32>
      %30 = vector.multi_reduction <add>, %29, %cst_17 [1] : vector<16x32xf32> to vector<16xf32>
      %31 = vector.shape_cast %30 : vector<16xf32> to vector<16x1xf32>
      %cst_18 = arith.constant 3.200000e+01 : f32
      %32 = vector.broadcast %cst_18 : f32 to vector<16x1xf32>
      %33 = arith.divf %31, %32 : vector<16x1xf32>
      %34 = arith.mulf %28, %28 : vector<16x1xf32>
      %35 = arith.subf %33, %34 : vector<16x1xf32>
      %36 = vector.broadcast %28 : vector<16x1xf32> to vector<16x32xf32>
      %37 = arith.subf %24, %36 : vector<16x32xf32>
      %cst_19 = arith.constant 9.99999974E-6 : f32
      %38 = vector.broadcast %cst_19 : f32 to vector<16x1xf32>
      %39 = arith.addf %35, %38 : vector<16x1xf32>
      %40 = math.rsqrt %39 : vector<16x1xf32>
      %41 = vector.broadcast %40 : vector<16x1xf32> to vector<16x32xf32>
      %42 = arith.mulf %37, %41 : vector<16x32xf32>
      %43 = vector.broadcast %15 : vector<1x32xf32> to vector<16x32xf32>
      %44 = arith.mulf %42, %43 : vector<16x32xf32>
      %45 = vector.broadcast %16 : vector<1x32xf32> to vector<16x32xf32>
      %46 = arith.addf %44, %45 : vector<16x32xf32>
      %47 = vector.extract_strided_slice %1 {offsets = [0, 0, 0], sizes = [2, 8, 6], strides = [1, 1, 1]} : vector<2x8x8xf32> to vector<2x8x6xf32>
      %48 = vector.shape_cast %47 : vector<2x8x6xf32> to vector<16x6xf32>
      %49 = vector.extract_strided_slice %48 {offsets = [0, 0], sizes = [16, 3], strides = [1, 1]} : vector<16x6xf32> to vector<16x3xf32>
      %50 = vector.extract_strided_slice %49 {offsets = [0, 0], sizes = [16, 1], strides = [1, 1]} : vector<16x3xf32> to vector<16x1xf32>
      %51 = vector.extract_strided_slice %21 {offsets = [0, 0], sizes = [1, 64], strides = [1, 1]} : vector<3x64xf32> to vector<1x64xf32>
      %52 = vector.broadcast %50 : vector<16x1xf32> to vector<16x64xf32>
      %53 = vector.broadcast %51 : vector<1x64xf32> to vector<16x64xf32>
      %54 = arith.mulf %52, %53 : vector<16x64xf32>
      %55 = vector.extract_strided_slice %49 {offsets = [0, 1], sizes = [16, 1], strides = [1, 1]} : vector<16x3xf32> to vector<16x1xf32>
      %56 = vector.extract_strided_slice %21 {offsets = [1, 0], sizes = [1, 64], strides = [1, 1]} : vector<3x64xf32> to vector<1x64xf32>
      %57 = vector.broadcast %55 : vector<16x1xf32> to vector<16x64xf32>
      %58 = vector.broadcast %56 : vector<1x64xf32> to vector<16x64xf32>
      %59 = arith.mulf %57, %58 : vector<16x64xf32>
      %60 = arith.addf %54, %59 : vector<16x64xf32>
      %61 = vector.extract_strided_slice %49 {offsets = [0, 2], sizes = [16, 1], strides = [1, 1]} : vector<16x3xf32> to vector<16x1xf32>
      %62 = vector.extract_strided_slice %21 {offsets = [2, 0], sizes = [1, 64], strides = [1, 1]} : vector<3x64xf32> to vector<1x64xf32>
      %63 = vector.broadcast %61 : vector<16x1xf32> to vector<16x64xf32>
      %64 = vector.broadcast %62 : vector<1x64xf32> to vector<16x64xf32>
      %65 = arith.mulf %63, %64 : vector<16x64xf32>
      %66 = arith.addf %60, %65 : vector<16x64xf32>
      %67 = vector.broadcast %22 : vector<1x64xf32> to vector<16x64xf32>
      %68 = arith.addf %66, %67 : vector<16x64xf32>
      %cst_20 = arith.constant 0.000000e+00 : f32
      %69 = vector.broadcast %cst_20 : f32 to vector<16x64xf32>
      %70 = arith.maximumf %68, %69 : vector<16x64xf32>
      %cst_21 = arith.constant dense<0.000000e+00> : vector<16x32xf32>
      %71 = tpu.matmul %70, %23, %cst_21 {dimension_numbers = #tpu.dot_dimension_numbers<[1], [0], [0], [1], [0, 0, 1, 1], [], []>} : vector<16x64xf32>, vector<64x32xf32>, vector<16x32xf32> -> vector<16x32xf32>
      %72 = vector.broadcast %17 : vector<1x32xf32> to vector<16x32xf32>
      %73 = arith.addf %71, %72 : vector<16x32xf32>
      %cst_22 = arith.constant dense<0.000000e+00> : vector<16xf32>
      %74 = vector.multi_reduction <add>, %73, %cst_22 [1] : vector<16x32xf32> to vector<16xf32>
      %75 = vector.shape_cast %74 : vector<16xf32> to vector<16x1xf32>
      %cst_23 = arith.constant 3.200000e+01 : f32
      %76 = vector.broadcast %cst_23 : f32 to vector<16x1xf32>
      %77 = arith.divf %75, %76 : vector<16x1xf32>
      %78 = arith.mulf %73, %73 : vector<16x32xf32>
      %cst_24 = arith.constant dense<0.000000e+00> : vector<16xf32>
      %79 = vector.multi_reduction <add>, %78, %cst_24 [1] : vector<16x32xf32> to vector<16xf32>
      %80 = vector.shape_cast %79 : vector<16xf32> to vector<16x1xf32>
      %cst_25 = arith.constant 3.200000e+01 : f32
      %81 = vector.broadcast %cst_25 : f32 to vector<16x1xf32>
      %82 = arith.divf %80, %81 : vector<16x1xf32>
      %83 = arith.mulf %77, %77 : vector<16x1xf32>
      %84 = arith.subf %82, %83 : vector<16x1xf32>
      %85 = vector.broadcast %77 : vector<16x1xf32> to vector<16x32xf32>
      %86 = arith.subf %73, %85 : vector<16x32xf32>
      %cst_26 = arith.constant 9.99999974E-6 : f32
      %87 = vector.broadcast %cst_26 : f32 to vector<16x1xf32>
      %88 = arith.addf %84, %87 : vector<16x1xf32>
      %89 = math.rsqrt %88 : vector<16x1xf32>
      %90 = vector.broadcast %89 : vector<16x1xf32> to vector<16x32xf32>
      %91 = arith.mulf %86, %90 : vector<16x32xf32>
      %92 = vector.broadcast %18 : vector<1x32xf32> to vector<16x32xf32>
      %93 = arith.mulf %91, %92 : vector<16x32xf32>
      %94 = vector.broadcast %19 : vector<1x32xf32> to vector<16x32xf32>
      %95 = arith.addf %93, %94 : vector<16x32xf32>
      %96 = vector.extract_strided_slice %48 {offsets = [0, 3], sizes = [16, 3], strides = [1, 1]} : vector<16x6xf32> to vector<16x3xf32>
      %97 = vector.extract_strided_slice %96 {offsets = [0, 0], sizes = [16, 1], strides = [1, 1]} : vector<16x3xf32> to vector<16x1xf32>
      %98 = vector.extract_strided_slice %21 {offsets = [0, 0], sizes = [1, 64], strides = [1, 1]} : vector<3x64xf32> to vector<1x64xf32>
      %99 = vector.broadcast %97 : vector<16x1xf32> to vector<16x64xf32>
      %100 = vector.broadcast %98 : vector<1x64xf32> to vector<16x64xf32>
      %101 = arith.mulf %99, %100 : vector<16x64xf32>
      %102 = vector.extract_strided_slice %96 {offsets = [0, 1], sizes = [16, 1], strides = [1, 1]} : vector<16x3xf32> to vector<16x1xf32>
      %103 = vector.extract_strided_slice %21 {offsets = [1, 0], sizes = [1, 64], strides = [1, 1]} : vector<3x64xf32> to vector<1x64xf32>
      %104 = vector.broadcast %102 : vector<16x1xf32> to vector<16x64xf32>
      %105 = vector.broadcast %103 : vector<1x64xf32> to vector<16x64xf32>
      %106 = arith.mulf %104, %105 : vector<16x64xf32>
      %107 = arith.addf %101, %106 : vector<16x64xf32>
      %108 = vector.extract_strided_slice %96 {offsets = [0, 2], sizes = [16, 1], strides = [1, 1]} : vector<16x3xf32> to vector<16x1xf32>
      %109 = vector.extract_strided_slice %21 {offsets = [2, 0], sizes = [1, 64], strides = [1, 1]} : vector<3x64xf32> to vector<1x64xf32>
      %110 = vector.broadcast %108 : vector<16x1xf32> to vector<16x64xf32>
      %111 = vector.broadcast %109 : vector<1x64xf32> to vector<16x64xf32>
      %112 = arith.mulf %110, %111 : vector<16x64xf32>
      %113 = arith.addf %107, %112 : vector<16x64xf32>
      %114 = vector.broadcast %22 : vector<1x64xf32> to vector<16x64xf32>
      %115 = arith.addf %113, %114 : vector<16x64xf32>
      %cst_27 = arith.constant 0.000000e+00 : f32
      %116 = vector.broadcast %cst_27 : f32 to vector<16x64xf32>
      %117 = arith.maximumf %115, %116 : vector<16x64xf32>
      %cst_28 = arith.constant dense<0.000000e+00> : vector<16x32xf32>
      %118 = tpu.matmul %117, %23, %cst_28 {dimension_numbers = #tpu.dot_dimension_numbers<[1], [0], [0], [1], [0, 0, 1, 1], [], []>} : vector<16x64xf32>, vector<64x32xf32>, vector<16x32xf32> -> vector<16x32xf32>
      %119 = vector.broadcast %17 : vector<1x32xf32> to vector<16x32xf32>
      %120 = arith.addf %118, %119 : vector<16x32xf32>
      %cst_29 = arith.constant dense<0.000000e+00> : vector<16xf32>
      %121 = vector.multi_reduction <add>, %120, %cst_29 [1] : vector<16x32xf32> to vector<16xf32>
      %122 = vector.shape_cast %121 : vector<16xf32> to vector<16x1xf32>
      %cst_30 = arith.constant 3.200000e+01 : f32
      %123 = vector.broadcast %cst_30 : f32 to vector<16x1xf32>
      %124 = arith.divf %122, %123 : vector<16x1xf32>
      %125 = arith.mulf %120, %120 : vector<16x32xf32>
      %cst_31 = arith.constant dense<0.000000e+00> : vector<16xf32>
      %126 = vector.multi_reduction <add>, %125, %cst_31 [1] : vector<16x32xf32> to vector<16xf32>
      %127 = vector.shape_cast %126 : vector<16xf32> to vector<16x1xf32>
      %cst_32 = arith.constant 3.200000e+01 : f32
      %128 = vector.broadcast %cst_32 : f32 to vector<16x1xf32>
      %129 = arith.divf %127, %128 : vector<16x1xf32>
      %130 = arith.mulf %124, %124 : vector<16x1xf32>
      %131 = arith.subf %129, %130 : vector<16x1xf32>
      %132 = vector.broadcast %124 : vector<16x1xf32> to vector<16x32xf32>
      %133 = arith.subf %120, %132 : vector<16x32xf32>
      %cst_33 = arith.constant 9.99999974E-6 : f32
      %134 = vector.broadcast %cst_33 : f32 to vector<16x1xf32>
      %135 = arith.addf %131, %134 : vector<16x1xf32>
      %136 = math.rsqrt %135 : vector<16x1xf32>
      %137 = vector.broadcast %136 : vector<16x1xf32> to vector<16x32xf32>
      %138 = arith.mulf %133, %137 : vector<16x32xf32>
      %139 = vector.broadcast %18 : vector<1x32xf32> to vector<16x32xf32>
      %140 = arith.mulf %138, %139 : vector<16x32xf32>
      %141 = vector.broadcast %19 : vector<1x32xf32> to vector<16x32xf32>
      %142 = arith.addf %140, %141 : vector<16x32xf32>
      %143 = arith.addf %95, %142 : vector<16x32xf32>
      %144 = vector.shape_cast %143 : vector<16x32xf32> to vector<2x8x32xf32>
      %c0_34 = arith.constant 0 : index
      %c0_35 = arith.constant 0 : index
      %c0_36 = arith.constant 0 : index
      %145 = vector.load %arg12[%c0_34, %c0_35, %c0_36] : memref<2x1x32xf32, #tpu.memory_space<vmem>>, vector<2x1x32xf32>
      %146 = vector.broadcast %145 : vector<2x1x32xf32> to vector<2x8x32xf32>
      %147 = arith.addf %144, %146 : vector<2x8x32xf32>
      %148 = vector.shape_cast %147 : vector<2x8x32xf32> to vector<16x32xf32>
      %c0_37 = arith.constant 0 : index
      %c0_38 = arith.constant 0 : index
      %149 = vector.load %arg8[%c0_37, %c0_38] : memref<32x64xf32, #tpu.memory_space<vmem>>, vector<32x64xf32>
      %cst_39 = arith.constant dense<0.000000e+00> : vector<16x64xf32>
      %150 = tpu.matmul %46, %149, %cst_39 {dimension_numbers = #tpu.dot_dimension_numbers<[1], [0], [0], [1], [0, 0, 1, 1], [], []>} : vector<16x32xf32>, vector<32x64xf32>, vector<16x64xf32> -> vector<16x64xf32>
      %c0_40 = arith.constant 0 : index
      %c0_41 = arith.constant 0 : index
      %151 = vector.load %arg9[%c0_40, %c0_41] : memref<32x64xf32, #tpu.memory_space<vmem>>, vector<32x64xf32>
      %cst_42 = arith.constant dense<0.000000e+00> : vector<16x64xf32>
      %152 = tpu.matmul %148, %151, %cst_42 {dimension_numbers = #tpu.dot_dimension_numbers<[1], [0], [0], [1], [0, 0, 1, 1], [], []>} : vector<16x32xf32>, vector<32x64xf32>, vector<16x64xf32> -> vector<16x64xf32>
      %153 = arith.addf %150, %152 : vector<16x64xf32>
      %c0_43 = arith.constant 0 : index
      %c0_44 = arith.constant 0 : index
      %154 = vector.load %arg10[%c0_43, %c0_44] : memref<1x64xf32, #tpu.memory_space<vmem>>, vector<1x64xf32>
      %155 = vector.broadcast %154 : vector<1x64xf32> to vector<16x64xf32>
      %156 = arith.addf %153, %155 : vector<16x64xf32>
      %157 = vector.extract_strided_slice %156 {offsets = [0, 0], sizes = [16, 32], strides = [1, 1]} : vector<16x64xf32> to vector<16x32xf32>
      %158 = vector.extract_strided_slice %156 {offsets = [0, 32], sizes = [16, 32], strides = [1, 1]} : vector<16x64xf32> to vector<16x32xf32>
      %159 = arith.mulf %157, %46 : vector<16x32xf32>
      %160 = arith.addf %159, %158 : vector<16x32xf32>
      %161 = vector.shape_cast %160 : vector<16x32xf32> to vector<2x8x32xf32>
      %162 = vector.shape_cast %5 : vector<2x8x1xi1> to vector<2x8x1xi1>
      %163 = vector.broadcast %162 : vector<2x8x1xi1> to vector<2x8x32xi1>
      %164 = vector.broadcast %cst_7 : f32 to vector<2x8x32xf32>
      %165 = arith.select %163, %161, %164 : vector<2x8x32xi1>, vector<2x8x32xf32>
      %cst_45 = arith.constant dense<0xFF800000> : vector<2x32xf32>
      %166 = vector.multi_reduction <maximumf>, %165, %cst_45 [1] : vector<2x8x32xf32> to vector<2x32xf32>
      %167 = vector.shape_cast %166 : vector<2x32xf32> to vector<2x1x32xf32>
      %c0_i32_46 = arith.constant 0 : i32
      %168 = arith.cmpi eq, %arg2, %c0_i32_46 : i32
      %169 = arith.extui %168 : i1 to i32
      %c0_i32_47 = arith.constant 0 : i32
      %170 = arith.cmpi ne, %169, %c0_i32_47 : i32
      scf.if %170 {
        %c0_50 = arith.constant 0 : index
        %c0_51 = arith.constant 0 : index
        %c0_52 = arith.constant 0 : index
        %174 = vector.load %arg11[%c0_50, %c0_51, %c0_52] : memref<2x1x32xf32, #tpu.memory_space<vmem>>, vector<2x1x32xf32>
        tpu.vector_store %arg11[%c0_50, %c0_51, %c0_52], %167 {strides = array<i32>} : memref<2x1x32xf32, #tpu.memory_space<vmem>>, vector<2x1x32xf32>,
      } else {
      }
      %c0_i32_48 = arith.constant 0 : i32
      %171 = arith.cmpi ne, %arg2, %c0_i32_48 : i32
      %172 = arith.extui %171 : i1 to i32
      %c0_i32_49 = arith.constant 0 : i32
      %173 = arith.cmpi ne, %172, %c0_i32_49 : i32
      scf.if %173 {
        %c0_50 = arith.constant 0 : index
        %c0_51 = arith.constant 0 : index
        %c0_52 = arith.constant 0 : index
        %174 = vector.load %arg11[%c0_50, %c0_51, %c0_52] : memref<2x1x32xf32, #tpu.memory_space<vmem>>, vector<2x1x32xf32>
        %175 = arith.maximumf %174, %167 : vector<2x1x32xf32>
        %c0_53 = arith.constant 0 : index
        %c0_54 = arith.constant 0 : index
        %c0_55 = arith.constant 0 : index
        %176 = vector.load %arg11[%c0_53, %c0_54, %c0_55] : memref<2x1x32xf32, #tpu.memory_space<vmem>>, vector<2x1x32xf32>
        tpu.vector_store %arg11[%c0_53, %c0_54, %c0_55], %175 {strides = array<i32>} : memref<2x1x32xf32, #tpu.memory_space<vmem>>, vector<2x1x32xf32>,
      } else {
      }
    } else {
    }
    return
  }
  func.func @transform_0(%arg0: i32, %arg1: i32, %arg2: i32) -> (i32, i32, i32) {
    %c0_i32 = arith.constant 0 : i32
    %c0_i32_0 = arith.constant 0 : i32
    return %arg0, %arg2, %c0_i32 : i32, i32, i32
  }
  func.func @transform_1(%arg0: i32, %arg1: i32, %arg2: i32) -> (i32, i32, i32) {
    %c0_i32 = arith.constant 0 : i32
    %c0_i32_0 = arith.constant 0 : i32
    return %arg0, %arg2, %c0_i32 : i32, i32, i32
  }
  func.func @transform_2(%arg0: i32, %arg1: i32, %arg2: i32) -> (i32, i32) {
    %c0_i32 = arith.constant 0 : i32
    %c0_i32_0 = arith.constant 0 : i32
    %c0_i32_1 = arith.constant 0 : i32
    return %c0_i32, %c0_i32_0 : i32, i32
  }
  func.func @transform_3(%arg0: i32, %arg1: i32, %arg2: i32) -> (i32, i32) {
    %c0_i32 = arith.constant 0 : i32
    %c0_i32_0 = arith.constant 0 : i32
    %c0_i32_1 = arith.constant 0 : i32
    return %c0_i32, %c0_i32_0 : i32, i32
  }
  func.func @transform_4(%arg0: i32, %arg1: i32, %arg2: i32) -> (i32, i32) {
    %c0_i32 = arith.constant 0 : i32
    %c0_i32_0 = arith.constant 0 : i32
    %c0_i32_1 = arith.constant 0 : i32
    return %c0_i32, %c0_i32_0 : i32, i32
  }
  func.func @transform_5(%arg0: i32, %arg1: i32, %arg2: i32) -> (i32, i32) {
    %c0_i32 = arith.constant 0 : i32
    %c0_i32_0 = arith.constant 0 : i32
    %c0_i32_1 = arith.constant 0 : i32
    return %c0_i32, %c0_i32_0 : i32, i32
  }
  func.func @transform_6(%arg0: i32, %arg1: i32, %arg2: i32) -> (i32, i32) {
    %c0_i32 = arith.constant 0 : i32
    %c0_i32_0 = arith.constant 0 : i32
    %c0_i32_1 = arith.constant 0 : i32
    return %c0_i32, %c0_i32_0 : i32, i32
  }
  func.func @transform_7(%arg0: i32, %arg1: i32, %arg2: i32) -> (i32, i32) {
    %c0_i32 = arith.constant 0 : i32
    %c0_i32_0 = arith.constant 0 : i32
    %c0_i32_1 = arith.constant 0 : i32
    return %c0_i32, %c0_i32_0 : i32, i32
  }
  func.func @transform_8(%arg0: i32, %arg1: i32, %arg2: i32) -> (i32, i32, i32) {
    %c0_i32 = arith.constant 0 : i32
    %c0_i32_0 = arith.constant 0 : i32
    %c0_i32_1 = arith.constant 0 : i32
    return %arg0, %c0_i32, %c0_i32_0 : i32, i32, i32
  }
}

module attributes {stable_mosaic.version = 11 : i64} {
  func.func @film_pool_kernel(%arg0: i32, %arg1: i32, %arg2: i32, %arg3: memref<2x8x32xf32, #tpu.memory_space<vmem>>, %arg4: memref<2x8x8xf32, #tpu.memory_space<vmem>>, %arg5: memref<8x32xf32, #tpu.memory_space<vmem>>, %arg6: memref<4x64xf32, #tpu.memory_space<vmem>>, %arg7: memref<64x32xf32, #tpu.memory_space<vmem>>, %arg8: memref<32x64xf32, #tpu.memory_space<vmem>>, %arg9: memref<32x64xf32, #tpu.memory_space<vmem>>, %arg10: memref<1x64xf32, #tpu.memory_space<vmem>>, %arg11: memref<2x1x32xf32, #tpu.memory_space<vmem>>, %arg12: memref<2x1x32xf32, #tpu.memory_space<vmem>>) attributes {dimension_semantics = [#tpu.dimension_semantics<parallel>, #tpu.dimension_semantics<arbitrary>, #tpu.dimension_semantics<arbitrary>], iteration_bounds = array<i64: 1, 2, 1>, scalar_prefetch = 0 : i64, scratch_operands = 1 : i64, tpu.core_type = #tpu.core_type<tc>, window_params = [{transform_indices = @transform_0, window_bounds = array<i64: 2, 8, 32>}, {transform_indices = @transform_1, window_bounds = array<i64: 2, 8, 8>}, {pipeline_mode = #tpu.pipeline_mode<synchronous>, transform_indices = @transform_2, window_bounds = array<i64: 8, 32>}, {pipeline_mode = #tpu.pipeline_mode<synchronous>, transform_indices = @transform_3, window_bounds = array<i64: 4, 64>}, {pipeline_mode = #tpu.pipeline_mode<synchronous>, transform_indices = @transform_4, window_bounds = array<i64: 64, 32>}, {pipeline_mode = #tpu.pipeline_mode<synchronous>, transform_indices = @transform_5, window_bounds = array<i64: 32, 64>}, {pipeline_mode = #tpu.pipeline_mode<synchronous>, transform_indices = @transform_6, window_bounds = array<i64: 32, 64>}, {pipeline_mode = #tpu.pipeline_mode<synchronous>, transform_indices = @transform_7, window_bounds = array<i64: 1, 64>}, {transform_indices = @transform_8, window_bounds = array<i64: 2, 1, 32>}]} {
    %c0 = arith.constant 0 : index
    %c0_0 = arith.constant 0 : index
    %c0_1 = arith.constant 0 : index
    %0 = vector.load %arg3[%c0, %c0_0, %c0_1] : memref<2x8x32xf32, #tpu.memory_space<vmem>>, vector<2x8x32xf32>
    %c0_2 = arith.constant 0 : index
    %c0_3 = arith.constant 0 : index
    %c0_4 = arith.constant 0 : index
    %1 = vector.load %arg4[%c0_2, %c0_3, %c0_4] : memref<2x8x8xf32, #tpu.memory_space<vmem>>, vector<2x8x8xf32>
    %2 = vector.extract_strided_slice %1 {offsets = [0, 0, 6], sizes = [2, 8, 1], strides = [1, 1, 1]} : vector<2x8x8xf32> to vector<2x8x1xf32>
    %3 = vector.extract_strided_slice %1 {offsets = [0, 0, 7], sizes = [2, 8, 1], strides = [1, 1, 1]} : vector<2x8x8xf32> to vector<2x8x1xf32>
    %cst = arith.constant 5.000000e-01 : f32
    %4 = vector.broadcast %cst : f32 to vector<2x8x1xf32>
    %5 = arith.cmpf ogt, %2, %4 : vector<2x8x1xf32>
    %6 = vector.broadcast %3 : vector<2x8x1xf32> to vector<2x8x32xf32>
    %7 = arith.mulf %0, %6 : vector<2x8x32xf32>
    %c0_i32 = arith.constant 0 : i32
    %8 = arith.cmpi eq, %arg1, %c0_i32 : i32
    %9 = arith.extui %8 : i1 to i32
    %cst_5 = arith.constant 0xFF800000 : f32
    %c0_i32_6 = arith.constant 0 : i32
    %10 = arith.cmpi ne, %9, %c0_i32_6 : i32
    scf.if %10 {
      %c0_i32_9 = arith.constant 0 : i32
      %14 = arith.cmpi eq, %arg2, %c0_i32_9 : i32
      %15 = arith.extui %14 : i1 to i32
      %c0_i32_10 = arith.constant 0 : i32
      %16 = arith.cmpi ne, %15, %c0_i32_10 : i32
      scf.if %16 {
        %26 = vector.broadcast %cst_5 : f32 to vector<2x1x32xf32>
        %c0_18 = arith.constant 0 : index
        %c0_19 = arith.constant 0 : index
        %c0_20 = arith.constant 0 : index
        %27 = vector.load %arg12[%c0_18, %c0_19, %c0_20] : memref<2x1x32xf32, #tpu.memory_space<vmem>>, vector<2x1x32xf32>
        tpu.vector_store %arg12[%c0_18, %c0_19, %c0_20], %26 {strides = array<i32>} : memref<2x1x32xf32, #tpu.memory_space<vmem>>, vector<2x1x32xf32>,
      } else {
      }
      %17 = vector.shape_cast %5 : vector<2x8x1xi1> to vector<2x8x1xi1>
      %18 = vector.broadcast %17 : vector<2x8x1xi1> to vector<2x8x32xi1>
      %19 = vector.broadcast %cst_5 : f32 to vector<2x8x32xf32>
      %20 = arith.select %18, %7, %19 : vector<2x8x32xi1>, vector<2x8x32xf32>
      %cst_11 = arith.constant dense<0xFF800000> : vector<2x32xf32>
      %21 = vector.multi_reduction <maximumf>, %20, %cst_11 [1] : vector<2x8x32xf32> to vector<2x32xf32>
      %22 = vector.shape_cast %21 : vector<2x32xf32> to vector<2x1x32xf32>
      %c0_12 = arith.constant 0 : index
      %c0_13 = arith.constant 0 : index
      %c0_14 = arith.constant 0 : index
      %23 = vector.load %arg12[%c0_12, %c0_13, %c0_14] : memref<2x1x32xf32, #tpu.memory_space<vmem>>, vector<2x1x32xf32>
      %24 = arith.maximumf %23, %22 : vector<2x1x32xf32>
      %c0_15 = arith.constant 0 : index
      %c0_16 = arith.constant 0 : index
      %c0_17 = arith.constant 0 : index
      %25 = vector.load %arg12[%c0_15, %c0_16, %c0_17] : memref<2x1x32xf32, #tpu.memory_space<vmem>>, vector<2x1x32xf32>
      tpu.vector_store %arg12[%c0_15, %c0_16, %c0_17], %24 {strides = array<i32>} : memref<2x1x32xf32, #tpu.memory_space<vmem>>, vector<2x1x32xf32>,
    } else {
    }
    %c1_i32 = arith.constant 1 : i32
    %11 = arith.cmpi eq, %arg1, %c1_i32 : i32
    %12 = arith.extui %11 : i1 to i32
    %cst_7 = arith.constant 0xFF800000 : f32
    %c0_i32_8 = arith.constant 0 : i32
    %13 = arith.cmpi ne, %12, %c0_i32_8 : i32
    scf.if %13 {
      %c0_9 = arith.constant 0 : index
      %c0_10 = arith.constant 0 : index
      %14 = vector.load %arg5[%c0_9, %c0_10] : memref<8x32xf32, #tpu.memory_space<vmem>>, vector<8x32xf32>
      %15 = vector.extract_strided_slice %14 {offsets = [0, 0], sizes = [1, 32], strides = [1, 1]} : vector<8x32xf32> to vector<1x32xf32>
      %16 = vector.extract_strided_slice %14 {offsets = [1, 0], sizes = [1, 32], strides = [1, 1]} : vector<8x32xf32> to vector<1x32xf32>
      %17 = vector.extract_strided_slice %14 {offsets = [2, 0], sizes = [1, 32], strides = [1, 1]} : vector<8x32xf32> to vector<1x32xf32>
      %18 = vector.extract_strided_slice %14 {offsets = [3, 0], sizes = [1, 32], strides = [1, 1]} : vector<8x32xf32> to vector<1x32xf32>
      %19 = vector.extract_strided_slice %14 {offsets = [4, 0], sizes = [1, 32], strides = [1, 1]} : vector<8x32xf32> to vector<1x32xf32>
      %c0_11 = arith.constant 0 : index
      %c0_12 = arith.constant 0 : index
      %20 = vector.load %arg6[%c0_11, %c0_12] : memref<4x64xf32, #tpu.memory_space<vmem>>, vector<4x64xf32>
      %21 = vector.extract_strided_slice %20 {offsets = [0, 0], sizes = [3, 64], strides = [1, 1]} : vector<4x64xf32> to vector<3x64xf32>
      %22 = vector.extract_strided_slice %20 {offsets = [3, 0], sizes = [1, 64], strides = [1, 1]} : vector<4x64xf32> to vector<1x64xf32>
      %c0_13 = arith.constant 0 : index
      %c0_14 = arith.constant 0 : index
      %23 = vector.load %arg7[%c0_13, %c0_14] : memref<64x32xf32, #tpu.memory_space<vmem>>, vector<64x32xf32>
      %24 = vector.shape_cast %7 : vector<2x8x32xf32> to vector<16x32xf32>
      %cst_15 = arith.constant dense<0.000000e+00> : vector<16xf32>
      %25 = vector.multi_reduction <add>, %24, %cst_15 [1] : vector<16x32xf32> to vector<16xf32>
      %26 = vector.shape_cast %25 : vector<16xf32> to vector<16x1xf32>
      %cst_16 = arith.constant 3.200000e+01 : f32
      %27 = vector.broadcast %cst_16 : f32 to vector<16x1xf32>
      %28 = arith.divf %26, %27 : vector<16x1xf32>
      %29 = arith.mulf %24, %24 : vector<16x32xf32>
      %cst_17 = arith.constant dense<0.000000e+00> : vector<16xf32>
      %30 = vector.multi_reduction <add>, %29, %cst_17 [1] : vector<16x32xf32> to vector<16xf32>
      %31 = vector.shape_cast %30 : vector<16xf32> to vector<16x1xf32>
      %cst_18 = arith.constant 3.200000e+01 : f32
      %32 = vector.broadcast %cst_18 : f32 to vector<16x1xf32>
      %33 = arith.divf %31, %32 : vector<16x1xf32>
      %34 = arith.mulf %28, %28 : vector<16x1xf32>
      %35 = arith.subf %33, %34 : vector<16x1xf32>
      %36 = vector.broadcast %28 : vector<16x1xf32> to vector<16x32xf32>
      %37 = arith.subf %24, %36 : vector<16x32xf32>
      %cst_19 = arith.constant 9.99999974E-6 : f32
      %38 = vector.broadcast %cst_19 : f32 to vector<16x1xf32>
      %39 = arith.addf %35, %38 : vector<16x1xf32>
      %40 = math.rsqrt %39 : vector<16x1xf32>
      %41 = vector.broadcast %40 : vector<16x1xf32> to vector<16x32xf32>
      %42 = arith.mulf %37, %41 : vector<16x32xf32>
      %43 = vector.broadcast %15 : vector<1x32xf32> to vector<16x32xf32>
      %44 = arith.mulf %42, %43 : vector<16x32xf32>
      %45 = vector.broadcast %16 : vector<1x32xf32> to vector<16x32xf32>
      %46 = arith.addf %44, %45 : vector<16x32xf32>
      %47 = vector.extract_strided_slice %1 {offsets = [0, 0, 0], sizes = [2, 8, 6], strides = [1, 1, 1]} : vector<2x8x8xf32> to vector<2x8x6xf32>
      %48 = vector.shape_cast %47 : vector<2x8x6xf32> to vector<16x6xf32>
      %49 = vector.extract_strided_slice %48 {offsets = [0, 0], sizes = [16, 3], strides = [1, 1]} : vector<16x6xf32> to vector<16x3xf32>
      %50 = vector.extract_strided_slice %49 {offsets = [0, 0], sizes = [16, 1], strides = [1, 1]} : vector<16x3xf32> to vector<16x1xf32>
      %51 = vector.extract_strided_slice %21 {offsets = [0, 0], sizes = [1, 64], strides = [1, 1]} : vector<3x64xf32> to vector<1x64xf32>
      %52 = vector.broadcast %50 : vector<16x1xf32> to vector<16x64xf32>
      %53 = vector.broadcast %51 : vector<1x64xf32> to vector<16x64xf32>
      %54 = arith.mulf %52, %53 : vector<16x64xf32>
      %55 = vector.extract_strided_slice %49 {offsets = [0, 1], sizes = [16, 1], strides = [1, 1]} : vector<16x3xf32> to vector<16x1xf32>
      %56 = vector.extract_strided_slice %21 {offsets = [1, 0], sizes = [1, 64], strides = [1, 1]} : vector<3x64xf32> to vector<1x64xf32>
      %57 = vector.broadcast %55 : vector<16x1xf32> to vector<16x64xf32>
      %58 = vector.broadcast %56 : vector<1x64xf32> to vector<16x64xf32>
      %59 = arith.mulf %57, %58 : vector<16x64xf32>
      %60 = arith.addf %54, %59 : vector<16x64xf32>
      %61 = vector.extract_strided_slice %49 {offsets = [0, 2], sizes = [16, 1], strides = [1, 1]} : vector<16x3xf32> to vector<16x1xf32>
      %62 = vector.extract_strided_slice %21 {offsets = [2, 0], sizes = [1, 64], strides = [1, 1]} : vector<3x64xf32> to vector<1x64xf32>
      %63 = vector.broadcast %61 : vector<16x1xf32> to vector<16x64xf32>
      %64 = vector.broadcast %62 : vector<1x64xf32> to vector<16x64xf32>
      %65 = arith.mulf %63, %64 : vector<16x64xf32>
      %66 = arith.addf %60, %65 : vector<16x64xf32>
      %67 = vector.broadcast %22 : vector<1x64xf32> to vector<16x64xf32>
      %68 = arith.addf %66, %67 : vector<16x64xf32>
      %cst_20 = arith.constant 0.000000e+00 : f32
      %69 = vector.broadcast %cst_20 : f32 to vector<16x64xf32>
      %70 = arith.maximumf %68, %69 : vector<16x64xf32>
      %cst_21 = arith.constant dense<0.000000e+00> : vector<16x32xf32>
      %71 = tpu.matmul %70, %23, %cst_21 {dimension_numbers = #tpu.dot_dimension_numbers<[1], [0], [0], [1], [0, 0, 1, 1], [], []>} : vector<16x64xf32>, vector<64x32xf32>, vector<16x32xf32> -> vector<16x32xf32>
      %72 = vector.broadcast %17 : vector<1x32xf32> to vector<16x32xf32>
      %73 = arith.addf %71, %72 : vector<16x32xf32>
      %cst_22 = arith.constant dense<0.000000e+00> : vector<16xf32>
      %74 = vector.multi_reduction <add>, %73, %cst_22 [1] : vector<16x32xf32> to vector<16xf32>
      %75 = vector.shape_cast %74 : vector<16xf32> to vector<16x1xf32>
      %cst_23 = arith.constant 3.200000e+01 : f32
      %76 = vector.broadcast %cst_23 : f32 to vector<16x1xf32>
      %77 = arith.divf %75, %76 : vector<16x1xf32>
      %78 = arith.mulf %73, %73 : vector<16x32xf32>
      %cst_24 = arith.constant dense<0.000000e+00> : vector<16xf32>
      %79 = vector.multi_reduction <add>, %78, %cst_24 [1] : vector<16x32xf32> to vector<16xf32>
      %80 = vector.shape_cast %79 : vector<16xf32> to vector<16x1xf32>
      %cst_25 = arith.constant 3.200000e+01 : f32
      %81 = vector.broadcast %cst_25 : f32 to vector<16x1xf32>
      %82 = arith.divf %80, %81 : vector<16x1xf32>
      %83 = arith.mulf %77, %77 : vector<16x1xf32>
      %84 = arith.subf %82, %83 : vector<16x1xf32>
      %85 = vector.broadcast %77 : vector<16x1xf32> to vector<16x32xf32>
      %86 = arith.subf %73, %85 : vector<16x32xf32>
      %cst_26 = arith.constant 9.99999974E-6 : f32
      %87 = vector.broadcast %cst_26 : f32 to vector<16x1xf32>
      %88 = arith.addf %84, %87 : vector<16x1xf32>
      %89 = math.rsqrt %88 : vector<16x1xf32>
      %90 = vector.broadcast %89 : vector<16x1xf32> to vector<16x32xf32>
      %91 = arith.mulf %86, %90 : vector<16x32xf32>
      %92 = vector.broadcast %18 : vector<1x32xf32> to vector<16x32xf32>
      %93 = arith.mulf %91, %92 : vector<16x32xf32>
      %94 = vector.broadcast %19 : vector<1x32xf32> to vector<16x32xf32>
      %95 = arith.addf %93, %94 : vector<16x32xf32>
      %96 = vector.extract_strided_slice %48 {offsets = [0, 3], sizes = [16, 3], strides = [1, 1]} : vector<16x6xf32> to vector<16x3xf32>
      %97 = vector.extract_strided_slice %96 {offsets = [0, 0], sizes = [16, 1], strides = [1, 1]} : vector<16x3xf32> to vector<16x1xf32>
      %98 = vector.extract_strided_slice %21 {offsets = [0, 0], sizes = [1, 64], strides = [1, 1]} : vector<3x64xf32> to vector<1x64xf32>
      %99 = vector.broadcast %97 : vector<16x1xf32> to vector<16x64xf32>
      %100 = vector.broadcast %98 : vector<1x64xf32> to vector<16x64xf32>
      %101 = arith.mulf %99, %100 : vector<16x64xf32>
      %102 = vector.extract_strided_slice %96 {offsets = [0, 1], sizes = [16, 1], strides = [1, 1]} : vector<16x3xf32> to vector<16x1xf32>
      %103 = vector.extract_strided_slice %21 {offsets = [1, 0], sizes = [1, 64], strides = [1, 1]} : vector<3x64xf32> to vector<1x64xf32>
      %104 = vector.broadcast %102 : vector<16x1xf32> to vector<16x64xf32>
      %105 = vector.broadcast %103 : vector<1x64xf32> to vector<16x64xf32>
      %106 = arith.mulf %104, %105 : vector<16x64xf32>
      %107 = arith.addf %101, %106 : vector<16x64xf32>
      %108 = vector.extract_strided_slice %96 {offsets = [0, 2], sizes = [16, 1], strides = [1, 1]} : vector<16x3xf32> to vector<16x1xf32>
      %109 = vector.extract_strided_slice %21 {offsets = [2, 0], sizes = [1, 64], strides = [1, 1]} : vector<3x64xf32> to vector<1x64xf32>
      %110 = vector.broadcast %108 : vector<16x1xf32> to vector<16x64xf32>
      %111 = vector.broadcast %109 : vector<1x64xf32> to vector<16x64xf32>
      %112 = arith.mulf %110, %111 : vector<16x64xf32>
      %113 = arith.addf %107, %112 : vector<16x64xf32>
      %114 = vector.broadcast %22 : vector<1x64xf32> to vector<16x64xf32>
      %115 = arith.addf %113, %114 : vector<16x64xf32>
      %cst_27 = arith.constant 0.000000e+00 : f32
      %116 = vector.broadcast %cst_27 : f32 to vector<16x64xf32>
      %117 = arith.maximumf %115, %116 : vector<16x64xf32>
      %cst_28 = arith.constant dense<0.000000e+00> : vector<16x32xf32>
      %118 = tpu.matmul %117, %23, %cst_28 {dimension_numbers = #tpu.dot_dimension_numbers<[1], [0], [0], [1], [0, 0, 1, 1], [], []>} : vector<16x64xf32>, vector<64x32xf32>, vector<16x32xf32> -> vector<16x32xf32>
      %119 = vector.broadcast %17 : vector<1x32xf32> to vector<16x32xf32>
      %120 = arith.addf %118, %119 : vector<16x32xf32>
      %cst_29 = arith.constant dense<0.000000e+00> : vector<16xf32>
      %121 = vector.multi_reduction <add>, %120, %cst_29 [1] : vector<16x32xf32> to vector<16xf32>
      %122 = vector.shape_cast %121 : vector<16xf32> to vector<16x1xf32>
      %cst_30 = arith.constant 3.200000e+01 : f32
      %123 = vector.broadcast %cst_30 : f32 to vector<16x1xf32>
      %124 = arith.divf %122, %123 : vector<16x1xf32>
      %125 = arith.mulf %120, %120 : vector<16x32xf32>
      %cst_31 = arith.constant dense<0.000000e+00> : vector<16xf32>
      %126 = vector.multi_reduction <add>, %125, %cst_31 [1] : vector<16x32xf32> to vector<16xf32>
      %127 = vector.shape_cast %126 : vector<16xf32> to vector<16x1xf32>
      %cst_32 = arith.constant 3.200000e+01 : f32
      %128 = vector.broadcast %cst_32 : f32 to vector<16x1xf32>
      %129 = arith.divf %127, %128 : vector<16x1xf32>
      %130 = arith.mulf %124, %124 : vector<16x1xf32>
      %131 = arith.subf %129, %130 : vector<16x1xf32>
      %132 = vector.broadcast %124 : vector<16x1xf32> to vector<16x32xf32>
      %133 = arith.subf %120, %132 : vector<16x32xf32>
      %cst_33 = arith.constant 9.99999974E-6 : f32
      %134 = vector.broadcast %cst_33 : f32 to vector<16x1xf32>
      %135 = arith.addf %131, %134 : vector<16x1xf32>
      %136 = math.rsqrt %135 : vector<16x1xf32>
      %137 = vector.broadcast %136 : vector<16x1xf32> to vector<16x32xf32>
      %138 = arith.mulf %133, %137 : vector<16x32xf32>
      %139 = vector.broadcast %18 : vector<1x32xf32> to vector<16x32xf32>
      %140 = arith.mulf %138, %139 : vector<16x32xf32>
      %141 = vector.broadcast %19 : vector<1x32xf32> to vector<16x32xf32>
      %142 = arith.addf %140, %141 : vector<16x32xf32>
      %143 = arith.addf %95, %142 : vector<16x32xf32>
      %144 = vector.shape_cast %143 : vector<16x32xf32> to vector<2x8x32xf32>
      %c0_34 = arith.constant 0 : index
      %c0_35 = arith.constant 0 : index
      %c0_36 = arith.constant 0 : index
      %145 = vector.load %arg12[%c0_34, %c0_35, %c0_36] : memref<2x1x32xf32, #tpu.memory_space<vmem>>, vector<2x1x32xf32>
      %146 = vector.broadcast %145 : vector<2x1x32xf32> to vector<2x8x32xf32>
      %147 = arith.addf %144, %146 : vector<2x8x32xf32>
      %148 = vector.shape_cast %147 : vector<2x8x32xf32> to vector<16x32xf32>
      %c0_37 = arith.constant 0 : index
      %c0_38 = arith.constant 0 : index
      %149 = vector.load %arg8[%c0_37, %c0_38] : memref<32x64xf32, #tpu.memory_space<vmem>>, vector<32x64xf32>
      %cst_39 = arith.constant dense<0.000000e+00> : vector<16x64xf32>
      %150 = tpu.matmul %46, %149, %cst_39 {dimension_numbers = #tpu.dot_dimension_numbers<[1], [0], [0], [1], [0, 0, 1, 1], [], []>} : vector<16x32xf32>, vector<32x64xf32>, vector<16x64xf32> -> vector<16x64xf32>
      %c0_40 = arith.constant 0 : index
      %c0_41 = arith.constant 0 : index
      %151 = vector.load %arg9[%c0_40, %c0_41] : memref<32x64xf32, #tpu.memory_space<vmem>>, vector<32x64xf32>
      %cst_42 = arith.constant dense<0.000000e+00> : vector<16x64xf32>
      %152 = tpu.matmul %148, %151, %cst_42 {dimension_numbers = #tpu.dot_dimension_numbers<[1], [0], [0], [1], [0, 0, 1, 1], [], []>} : vector<16x32xf32>, vector<32x64xf32>, vector<16x64xf32> -> vector<16x64xf32>
      %153 = arith.addf %150, %152 : vector<16x64xf32>
      %c0_43 = arith.constant 0 : index
      %c0_44 = arith.constant 0 : index
      %154 = vector.load %arg10[%c0_43, %c0_44] : memref<1x64xf32, #tpu.memory_space<vmem>>, vector<1x64xf32>
      %155 = vector.broadcast %154 : vector<1x64xf32> to vector<16x64xf32>
      %156 = arith.addf %153, %155 : vector<16x64xf32>
      %157 = vector.extract_strided_slice %156 {offsets = [0, 0], sizes = [16, 32], strides = [1, 1]} : vector<16x64xf32> to vector<16x32xf32>
      %158 = vector.extract_strided_slice %156 {offsets = [0, 32], sizes = [16, 32], strides = [1, 1]} : vector<16x64xf32> to vector<16x32xf32>
      %159 = arith.mulf %157, %46 : vector<16x32xf32>
      %160 = arith.addf %159, %158 : vector<16x32xf32>
      %161 = vector.shape_cast %160 : vector<16x32xf32> to vector<2x8x32xf32>
      %162 = vector.shape_cast %5 : vector<2x8x1xi1> to vector<2x8x1xi1>
      %163 = vector.broadcast %162 : vector<2x8x1xi1> to vector<2x8x32xi1>
      %164 = vector.broadcast %cst_7 : f32 to vector<2x8x32xf32>
      %165 = arith.select %163, %161, %164 : vector<2x8x32xi1>, vector<2x8x32xf32>
      %cst_45 = arith.constant dense<0xFF800000> : vector<2x32xf32>
      %166 = vector.multi_reduction <maximumf>, %165, %cst_45 [1] : vector<2x8x32xf32> to vector<2x32xf32>
      %167 = vector.shape_cast %166 : vector<2x32xf32> to vector<2x1x32xf32>
      %c0_i32_46 = arith.constant 0 : i32
      %168 = arith.cmpi eq, %arg2, %c0_i32_46 : i32
      %169 = arith.extui %168 : i1 to i32
      %c0_i32_47 = arith.constant 0 : i32
      %170 = arith.cmpi ne, %169, %c0_i32_47 : i32
      scf.if %170 {
        %c0_50 = arith.constant 0 : index
        %c0_51 = arith.constant 0 : index
        %c0_52 = arith.constant 0 : index
        %174 = vector.load %arg11[%c0_50, %c0_51, %c0_52] : memref<2x1x32xf32, #tpu.memory_space<vmem>>, vector<2x1x32xf32>
        tpu.vector_store %arg11[%c0_50, %c0_51, %c0_52], %167 {strides = array<i32>} : memref<2x1x32xf32, #tpu.memory_space<vmem>>, vector<2x1x32xf32>,
      } else {
      }
      %c0_i32_48 = arith.constant 0 : i32
      %171 = arith.cmpi ne, %arg2, %c0_i32_48 : i32
      %172 = arith.extui %171 : i1 to i32
      %c0_i32_49 = arith.constant 0 : i32
      %173 = arith.cmpi ne, %172, %c0_i32_49 : i32
      scf.if %173 {
        %c0_50 = arith.constant 0 : index
        %c0_51 = arith.constant 0 : index
        %c0_52 = arith.constant 0 : index
        %174 = vector.load %arg11[%c0_50, %c0_51, %c0_52] : memref<2x1x32xf32, #tpu.memory_space<vmem>>, vector<2x1x32xf32>
        %175 = arith.maximumf %174, %167 : vector<2x1x32xf32>
        %c0_53 = arith.constant 0 : index
        %c0_54 = arith.constant 0 : index
        %c0_55 = arith.constant 0 : index
        %176 = vector.load %arg11[%c0_53, %c0_54, %c0_55] : memref<2x1x32xf32, #tpu.memory_space<vmem>>, vector<2x1x32xf32>
        tpu.vector_store %arg11[%c0_53, %c0_54, %c0_55], %175 {strides = array<i32>} : memref<2x1x32xf32, #tpu.memory_space<vmem>>, vector<2x1x32xf32>,
      } else {
      }
    } else {
    }
    return
  }
  func.func @transform_0(%arg0: i32, %arg1: i32, %arg2: i32) -> (i32, i32, i32) {
    %c0_i32 = arith.constant 0 : i32
    %c0_i32_0 = arith.constant 0 : i32
    return %arg0, %arg2, %c0_i32 : i32, i32, i32
  }
  func.func @transform_1(%arg0: i32, %arg1: i32, %arg2: i32) -> (i32, i32, i32) {
    %c0_i32 = arith.constant 0 : i32
    %c0_i32_0 = arith.constant 0 : i32
    return %arg0, %arg2, %c0_i32 : i32, i32, i32
  }
  func.func @transform_2(%arg0: i32, %arg1: i32, %arg2: i32) -> (i32, i32) {
    %c0_i32 = arith.constant 0 : i32
    %c0_i32_0 = arith.constant 0 : i32
    %c0_i32_1 = arith.constant 0 : i32
    return %c0_i32, %c0_i32_0 : i32, i32
  }
  func.func @transform_3(%arg0: i32, %arg1: i32, %arg2: i32) -> (i32, i32) {
    %c0_i32 = arith.constant 0 : i32
    %c0_i32_0 = arith.constant 0 : i32
    %c0_i32_1 = arith.constant 0 : i32
    return %c0_i32, %c0_i32_0 : i32, i32
  }
  func.func @transform_4(%arg0: i32, %arg1: i32, %arg2: i32) -> (i32, i32) {
    %c0_i32 = arith.constant 0 : i32
    %c0_i32_0 = arith.constant 0 : i32
    %c0_i32_1 = arith.constant 0 : i32
    return %c0_i32, %c0_i32_0 : i32, i32
  }
  func.func @transform_5(%arg0: i32, %arg1: i32, %arg2: i32) -> (i32, i32) {
    %c0_i32 = arith.constant 0 : i32
    %c0_i32_0 = arith.constant 0 : i32
    %c0_i32_1 = arith.constant 0 : i32
    return %c0_i32, %c0_i32_0 : i32, i32
  }
  func.func @transform_6(%arg0: i32, %arg1: i32, %arg2: i32) -> (i32, i32) {
    %c0_i32 = arith.constant 0 : i32
    %c0_i32_0 = arith.constant 0 : i32
    %c0_i32_1 = arith.constant 0 : i32
    return %c0_i32, %c0_i32_0 : i32, i32
  }
  func.func @transform_7(%arg0: i32, %arg1: i32, %arg2: i32) -> (i32, i32) {
    %c0_i32 = arith.constant 0 : i32
    %c0_i32_0 = arith.constant 0 : i32
    %c0_i32_1 = arith.constant 0 : i32
    return %c0_i32, %c0_i32_0 : i32, i32
  }
  func.func @transform_8(%arg0: i32, %arg1: i32, %arg2: i32) -> (i32, i32, i32) {
    %c0_i32 = arith.constant 0 : i32
    %c0_i32_0 = arith.constant 0 : i32
    %c0_i32_1 = arith.constant 0 : i32
    return %arg0, %c0_i32, %c0_i32_0 : i32, i32, i32
  }
}

</mosaic_0001>

<llo_original>
// kernel: tpu_custom_call.1
$region0: #{tpu_custom_call.1}
  #allocation0 [shape = 'u32[]', space=smem, size = 0x4, offset = 0x4, fixed_abs, tag = 'smem constant byte address 0x4 - core index']
  #allocation1 [shape = 'u32[72,128]{1,0:T(1,128)}', space=vmem, size = 0x9000, scoped, tag = 'internal scratch']
  #allocation2 [shape = 'f32[2,1,32]{2,1,0:T(1,128)}', space=vmem, size = 0x400, scoped, tag = 'scratch operand']
  %s0 = inlined_call_operand.vmem [shape: f32[2,8,32], index: 0, kind: input, shape index: {}]
  %s1 = inlined_call_operand.vmem [shape: f32[2,8,8], index: 1, kind: input, shape index: {}]
  %s2 = inlined_call_operand.hbm [shape: f32[8,32], index: 2, kind: input, shape index: {}]
  %s3 = inlined_call_operand.hbm [shape: f32[4,64], index: 3, kind: input, shape index: {}]
  %s4 = inlined_call_operand.vmem [shape: f32[64,32], index: 4, kind: input, shape index: {}]
  %s5 = inlined_call_operand.vmem [shape: f32[32,64], index: 5, kind: input, shape index: {}]
  %s6 = inlined_call_operand.vmem [shape: f32[32,64], index: 6, kind: input, shape index: {}]
  %s7 = inlined_call_operand.vmem [shape: f32[1,64], index: 7, kind: input, shape index: {}]
  %s8 = inlined_call_operand.hbm [shape: f32[2,1,32], index: 8, kind: output, shape index: {}]
  %s9 = sld [smem:[#allocation0]]
  $region93: #{tpu_custom_call.1} parent=0
    _
  %s11 = ssub.s32 1, %s9
  %s12 = scalar_select 0, %s11, %s9
  $region1: #{tpu_custom_call.1} parent=0
    #allocation3 [shape = 'u8[4096]{0}', space=vmem, size = 0x1000, scoped, tag = 'input window, operand 2, single buffered']
    #allocation4 [shape = 's32[2]{0}', space=sflag, size = 0x8, scoped, tag = 'scoped memory for tpu_custom_call.1']
    #allocation5 [shape = 's32[2]{0}', space=sflag, size = 0x8, scoped, tag = 'scoped memory for tpu_custom_call.1']
    #allocation6 [shape = 'u8[2048]{0}', space=vmem, size = 0x800, scoped, tag = 'input window, operand 3, single buffered']
    #allocation7 [shape = 's32[1]{0}', space=sflag, size = 0x4, scoped, tag = 'scoped memory for tpu_custom_call.1']
    #allocation8 [shape = 'u8[1024]{0}', space=vmem, size = 0x400, scoped, tag = 'output window, operand 0, single buffered']
    %13 = vsyncpa [#allocation4], 0
    %14 = vsyncpa [#allocation7], 0
    %15 = vsyncpa [#allocation5], 0
    loop: start=0, step=1, limit=4
    $region2: #{tpu_custom_call.1} parent=1 // loop_pre_header
      _
    $region3: #{tpu_custom_call.1} parent=1 // loop_header
      %s17 = sphi 0, %s21
      %p18 = scmp.ge.s32.totalorder %s17, 4
      %s24 = sphi 0, %s43
      %s25 = sphi 0, %s39
      %s26 = sphi 0, %s35
      %s27 = sphi 0, %s24
      %s28 = sphi 0, %s25
      %s29 = sphi 0, %s26
      %s30 = sphi 0, %s27
      %s31 = sphi 0, %s28
      %s32 = sphi 0, %s29
      %s48 = sphi 0, %s50
      %s51 = sphi 0, %s48
      %s52 = sphi 0, %s51
      %s68 = sphi 0, %s52
      %s76 = sphi 0, %s78
      %s79 = sphi 0, %s76
      %s80 = sphi 0, %s79
      %s96 = sphi 0, %s80
      %s100 = sphi 0, %s100
      %s102 = sphi 0, %s100
      %s103 = sphi 0, %s102
      %s117 = sphi 0, %s103
      %s121 = sphi 0, %s121
      %s123 = sphi 0, %s121
      %s124 = sphi 0, %s123
      %s138 = sphi 0, %s124
      %s142 = sphi 0, %s142
      %s144 = sphi 0, %s142
      %s145 = sphi 0, %s144
      %s159 = sphi 0, %s145
      %s163 = sphi 0, %s163
      %s165 = sphi 0, %s163
      %s166 = sphi 0, %s165
      %s180 = sphi 0, %s166
      %s184 = sphi 0, %s184
      %s186 = sphi 0, %s184
      %s187 = sphi 0, %s186
      %s201 = sphi 0, %s187
      %s205 = sphi 0, %s205
      %s207 = sphi 0, %s205
      %s208 = sphi 0, %s207
      %s222 = sphi 0, %s208
      %s228 = sphi 0, %s230
      %s231 = sphi 0, %s228
      %s232 = sphi 0, %s231
      %s248 = sphi 0, %s232
    $region4: #{tpu_custom_call.1} parent=1 // loop_header_branch
      %20 = sbr.rel (%p18) target = $region8
    $region5: #{tpu_custom_call.1} parent=1 // loop_body
      %s22 = ssub.s32 %s17, 1
      %s23 = ssub.s32 %s17, 2
      %s33 = sadd.s32 1, %s26
      %p34 = scmp.ge.s32.totalorder %s33, 1
      %s35 = scalar_select %p34, 0, %s33
      %s36 = sadd.s32 1, %s25
      %s37 = scalar_select %p34, %s36, %s25
      %p38 = scmp.ge.s32.totalorder %s37, 2
      %s39 = scalar_select %p38, 0, %s37
      %s40 = sadd.s32 1, %s24
      %s41 = scalar_select %p38, %s40, %s24
      %p42 = scmp.ge.s32.totalorder %s41, 1
      %s43 = scalar_select %p42, 0, %s41
      %s44 = ssub.s32 %s24, %s43
      %s45 = ssub.s32 %s26, %s35
      %s46 = sor.u32 %s44, %s45
      %p47 = scmp.eq.s32.totalorder %s46, 0
      %s49 = sadd.s32 %s48, 1
      %s50 = scalar_select %p47, %s48, %s49
      %p53 = pneg %p47
      %p54 = scmp.eq.s32.totalorder %s17, 1
      %p55 = por %p53, %p54
      %p56 = scmp.ne.s32.totalorder %s48, %s51
      %p57 = scmp.eq.s32.totalorder %s17, 0
      %p58 = por %p56, %p57
      %p59 = scmp.ne.s32.totalorder %s48, %s51
      %p60 = scmp.eq.s32.totalorder %s22, 1
      %p61 = por %p59, %p60
      %p62 = scmp.ne.s32.totalorder %s51, %s52
      %p63 = scmp.eq.s32.totalorder %s22, 0
      %p64 = por %p62, %p63
      %p65 = scmp.ne.s32.totalorder %s51, %s52
      %p66 = scmp.eq.s32.totalorder %s23, 1
      %p67 = por %p65, %p66
      %p69 = scmp.ne.s32.totalorder %s52, %s68
      %p70 = scmp.eq.s32.totalorder %s23, 0
      %p71 = por %p69, %p70
      %s72 = ssub.s32 %s24, %s43
      %s73 = ssub.s32 %s26, %s35
      %s74 = sor.u32 %s72, %s73
      %p75 = scmp.eq.s32.totalorder %s74, 0
      %s77 = sadd.s32 %s76, 1
      %s78 = scalar_select %p75, %s76, %s77
      %p81 = pneg %p75
      %p82 = scmp.eq.s32.totalorder %s17, 1
      %p83 = por %p81, %p82
      %p84 = scmp.ne.s32.totalorder %s76, %s79
      %p85 = scmp.eq.s32.totalorder %s17, 0
      %p86 = por %p84, %p85
      %p87 = scmp.ne.s32.totalorder %s76, %s79
      %p88 = scmp.eq.s32.totalorder %s22, 1
      %p89 = por %p87, %p88
      %p90 = scmp.ne.s32.totalorder %s79, %s80
      %p91 = scmp.eq.s32.totalorder %s22, 0
      %p92 = por %p90, %p91
      %p93 = scmp.ne.s32.totalorder %s79, %s80
      %p94 = scmp.eq.s32.totalorder %s23, 1
      %p95 = por %p93, %p94
      %p97 = scmp.ne.s32.totalorder %s80, %s96
      %p98 = scmp.eq.s32.totalorder %s23, 0
      %p99 = por %p97, %p98
      %s101 = sadd.s32 %s100, 1
      %p104 = scmp.eq.s32.totalorder %s17, 1
      %p105 = scmp.ne.s32.totalorder %s100, %s102
      %p106 = scmp.eq.s32.totalorder %s17, 0
      %p107 = por %p105, %p106
      %p108 = scmp.ne.s32.totalorder %s100, %s102
      %p109 = scmp.eq.s32.totalorder %s22, 1
      %p110 = por %p108, %p109
      %p111 = scmp.ne.s32.totalorder %s102, %s103
      %p112 = scmp.eq.s32.totalorder %s22, 0
      %p113 = por %p111, %p112
      %p114 = scmp.ne.s32.totalorder %s102, %s103
      %p115 = scmp.eq.s32.totalorder %s23, 1
      %p116 = por %p114, %p115
      %p118 = scmp.ne.s32.totalorder %s103, %s117
      %p119 = scmp.eq.s32.totalorder %s23, 0
      %p120 = por %p118, %p119
      %s122 = sadd.s32 %s121, 1
      %p125 = scmp.eq.s32.totalorder %s17, 1
      %p126 = scmp.ne.s32.totalorder %s121, %s123
      %p127 = scmp.eq.s32.totalorder %s17, 0
      %p128 = por %p126, %p127
      %p129 = scmp.ne.s32.totalorder %s121, %s123
      %p130 = scmp.eq.s32.totalorder %s22, 1
      %p131 = por %p129, %p130
      %p132 = scmp.ne.s32.totalorder %s123, %s124
      %p133 = scmp.eq.s32.totalorder %s22, 0
      %p134 = por %p132, %p133
      %p135 = scmp.ne.s32.totalorder %s123, %s124
      %p136 = scmp.eq.s32.totalorder %s23, 1
      %p137 = por %p135, %p136
      %p139 = scmp.ne.s32.totalorder %s124, %s138
      %p140 = scmp.eq.s32.totalorder %s23, 0
      %p141 = por %p139, %p140
      %s143 = sadd.s32 %s142, 1
      %p146 = scmp.eq.s32.totalorder %s17, 1
      %p147 = scmp.ne.s32.totalorder %s142, %s144
      %p148 = scmp.eq.s32.totalorder %s17, 0
      %p149 = por %p147, %p148
      %p150 = scmp.ne.s32.totalorder %s142, %s144
      %p151 = scmp.eq.s32.totalorder %s22, 1
      %p152 = por %p150, %p151
      %p153 = scmp.ne.s32.totalorder %s144, %s145
      %p154 = scmp.eq.s32.totalorder %s22, 0
      %p155 = por %p153, %p154
      %p156 = scmp.ne.s32.totalorder %s144, %s145
      %p157 = scmp.eq.s32.totalorder %s23, 1
      %p158 = por %p156, %p157
      %p160 = scmp.ne.s32.totalorder %s145, %s159
      %p161 = scmp.eq.s32.totalorder %s23, 0
      %p162 = por %p160, %p161
      %s164 = sadd.s32 %s163, 1
      %p167 = scmp.eq.s32.totalorder %s17, 1
      %p168 = scmp.ne.s32.totalorder %s163, %s165
      %p169 = scmp.eq.s32.totalorder %s17, 0
      %p170 = por %p168, %p169
      %p171 = scmp.ne.s32.totalorder %s163, %s165
      %p172 = scmp.eq.s32.totalorder %s22, 1
      %p173 = por %p171, %p172
      %p174 = scmp.ne.s32.totalorder %s165, %s166
      %p175 = scmp.eq.s32.totalorder %s22, 0
      %p176 = por %p174, %p175
      %p177 = scmp.ne.s32.totalorder %s165, %s166
      %p178 = scmp.eq.s32.totalorder %s23, 1
      %p179 = por %p177, %p178
      %p181 = scmp.ne.s32.totalorder %s166, %s180
      %p182 = scmp.eq.s32.totalorder %s23, 0
      %p183 = por %p181, %p182
      %s185 = sadd.s32 %s184, 1
      %p188 = scmp.eq.s32.totalorder %s17, 1
      %p189 = scmp.ne.s32.totalorder %s184, %s186
      %p190 = scmp.eq.s32.totalorder %s17, 0
      %p191 = por %p189, %p190
      %p192 = scmp.ne.s32.totalorder %s184, %s186
      %p193 = scmp.eq.s32.totalorder %s22, 1
      %p194 = por %p192, %p193
      %p195 = scmp.ne.s32.totalorder %s186, %s187
      %p196 = scmp.eq.s32.totalorder %s22, 0
      %p197 = por %p195, %p196
      %p198 = scmp.ne.s32.totalorder %s186, %s187
      %p199 = scmp.eq.s32.totalorder %s23, 1
      %p200 = por %p198, %p199
      %p202 = scmp.ne.s32.totalorder %s187, %s201
      %p203 = scmp.eq.s32.totalorder %s23, 0
      %p204 = por %p202, %p203
      %s206 = sadd.s32 %s205, 1
      %p209 = scmp.eq.s32.totalorder %s17, 1
      %p210 = scmp.ne.s32.totalorder %s205, %s207
      %p211 = scmp.eq.s32.totalorder %s17, 0
      %p212 = por %p210, %p211
      %p213 = scmp.ne.s32.totalorder %s205, %s207
      %p214 = scmp.eq.s32.totalorder %s22, 1
      %p215 = por %p213, %p214
      %p216 = scmp.ne.s32.totalorder %s207, %s208
      %p217 = scmp.eq.s32.totalorder %s22, 0
      %p218 = por %p216, %p217
      %p219 = scmp.ne.s32.totalorder %s207, %s208
      %p220 = scmp.eq.s32.totalorder %s23, 1
      %p221 = por %p219, %p220
      %p223 = scmp.ne.s32.totalorder %s208, %s222
      %p224 = scmp.eq.s32.totalorder %s23, 0
      %p225 = por %p223, %p224
      %s226 = ssub.s32 %s24, %s43
      %p227 = scmp.eq.s32.totalorder %s226, 0
      %s229 = sadd.s32 %s228, 1
      %s230 = scalar_select %p227, %s228, %s229
      %p233 = pneg %p227
      %p234 = scmp.eq.s32.totalorder %s17, 1
      %p235 = por %p233, %p234
      %p236 = scmp.ne.s32.totalorder %s228, %s231
      %p237 = scmp.eq.s32.totalorder %s17, 0
      %p238 = por %p236, %p237
      %p239 = scmp.ne.s32.totalorder %s228, %s231
      %p240 = scmp.eq.s32.totalorder %s22, 1
      %p241 = por %p239, %p240
      %p242 = scmp.ne.s32.totalorder %s231, %s232
      %p243 = scmp.eq.s32.totalorder %s22, 0
      %p244 = por %p242, %p243
      %p245 = scmp.ne.s32.totalorder %s231, %s232
      %p246 = scmp.eq.s32.totalorder %s23, 1
      %p247 = por %p245, %p246
      %p249 = scmp.ne.s32.totalorder %s232, %s248
      %p250 = scmp.eq.s32.totalorder %s23, 0
      %p251 = por %p249, %p250
      %p252 = scmp.le.s32.totalorder 1, %s17
      %p253 = scmp.lt.s32.totalorder %s17, 3
      %p254 = pnand %p252, %p253
      %p255 = pneg %p254
      // Predicated region
      $region9: #{tpu_custom_call.1} parent=5 // pred_check
        _
      $region10: #{tpu_custom_call.1} parent=5 // pred_check_branch
        %257 = sbr.rel (%p254) target = $region12
      $region11: #{tpu_custom_call.1} parent=5 // pred_region
        %s258 = ssub.s32 %s17, 1
        // Predicated region
        $region13: #{tpu_custom_call.1} parent=11 // pred_check
          %p259 = pneg %p64
        $region14: #{tpu_custom_call.1} parent=11 // pred_check_branch
          %261 = sbr.rel (%p259) target = $region16
        $region15: #{tpu_custom_call.1} parent=11 // pred_region
          %s262 = smul.u32 2, %s27
          %p263 = scmp.lt.s32.totalorder %s262, 1
          %s264 = scalar_select %p263, %s262, 1
          %p265 = scmp.lt.s32.totalorder %s29, 0
          %s266 = scalar_select %p265, %s29, 0
          %s267 = sadd.s32 %s266, %s264
          %s268 = smul.addr %s267, 8
          %s269 = scalar_lea.vmem %s0, %s268
          %s270 = smul.u32 2, %s27
        $region16: #{tpu_custom_call.1} parent=11 // pred_fallthru
          _
        // Predicated region
        $region17: #{tpu_custom_call.1} parent=11 // pred_check
          %p271 = pneg %p92
        $region18: #{tpu_custom_call.1} parent=11 // pred_check_branch
          %273 = sbr.rel (%p271) target = $region20
        $region19: #{tpu_custom_call.1} parent=11 // pred_region
          %s274 = smul.u32 2, %s27
          %p275 = scmp.lt.s32.totalorder %s274, 1
          %s276 = scalar_select %p275, %s274, 1
          %p277 = scmp.lt.s32.totalorder %s29, 0
          %s278 = scalar_select %p277, %s29, 0
          %s279 = sadd.s32 %s278, %s276
          %s280 = smul.addr %s279, 8
          %s281 = scalar_lea.vmem %s1, %s280
          %s282 = smul.u32 2, %s27
        $region20: #{tpu_custom_call.1} parent=11 // pred_fallthru
          _
        // Predicated region
        $region21: #{tpu_custom_call.1} parent=11 // pred_check
          %p283 = pneg %p113
        $region22: #{tpu_custom_call.1} parent=11 // pred_check_branch
          %285 = sbr.rel (%p283) target = $region24
        $region23: #{tpu_custom_call.1} parent=11 // pred_region
          %287 = vsyncadd [#allocation4], 0
          %s289 = sshll.u32 %s2, 4
          %s290 = int_to_ptr.hbm [resolvable:$true] %s289
          %s291 = sshll.u32 [#allocation3], 4
          %s292 = int_to_ptr.vmem [resolvable:$true] %s291
          %294 = dma.hbm_to_vmem [thread:$0]  %s290, 128, %s292, [#allocation4]
        $region24: #{tpu_custom_call.1} parent=11 // pred_fallthru
          _
        // Predicated region
        $region25: #{tpu_custom_call.1} parent=11 // pred_check
          %p295 = pneg %p134
        $region26: #{tpu_custom_call.1} parent=11 // pred_check_branch
          %297 = sbr.rel (%p295) target = $region28
        $region27: #{tpu_custom_call.1} parent=11 // pred_region
          %299 = vsyncadd [#allocation7], 0
          %s301 = sshll.u32 %s3, 4
          %s302 = int_to_ptr.hbm [resolvable:$true] %s301
          %s303 = sshll.u32 [#allocation6], 4
          %s304 = int_to_ptr.vmem [resolvable:$true] %s303
          %306 = dma.hbm_to_vmem [thread:$0]  %s302, 64, %s304, [#allocation7]
        $region28: #{tpu_custom_call.1} parent=11 // pred_fallthru
          _
        // Predicated region
        $region29: #{tpu_custom_call.1} parent=11 // pred_check
          %p307 = pneg %p155
        $region30: #{tpu_custom_call.1} parent=11 // pred_check_branch
          %309 = sbr.rel (%p307) target = $region32
        $region31: #{tpu_custom_call.1} parent=11 // pred_region
          _
        $region32: #{tpu_custom_call.1} parent=11 // pred_fallthru
          _
        // Predicated region
        $region33: #{tpu_custom_call.1} parent=11 // pred_check
          %p310 = pneg %p176
        $region34: #{tpu_custom_call.1} parent=11 // pred_check_branch
          %312 = sbr.rel (%p310) target = $region36
        $region35: #{tpu_custom_call.1} parent=11 // pred_region
          _
        $region36: #{tpu_custom_call.1} parent=11 // pred_fallthru
          _
        // Predicated region
        $region37: #{tpu_custom_call.1} parent=11 // pred_check
          %p313 = pneg %p197
        $region38: #{tpu_custom_call.1} parent=11 // pred_check_branch
          %315 = sbr.rel (%p313) target = $region40
        $region39: #{tpu_custom_call.1} parent=11 // pred_region
          _
        $region40: #{tpu_custom_call.1} parent=11 // pred_fallthru
          _
        // Predicated region
        $region41: #{tpu_custom_call.1} parent=11 // pred_check
          %p316 = pneg %p218
        $region42: #{tpu_custom_call.1} parent=11 // pred_check_branch
          %318 = sbr.rel (%p316) target = $region44
        $region43: #{tpu_custom_call.1} parent=11 // pred_region
          _
        $region44: #{tpu_custom_call.1} parent=11 // pred_fallthru
          _
      $region12: #{tpu_custom_call.1} parent=5 // pred_fallthru
        _
      %p319 = scmp.lt.s32.totalorder %s17, 2
      // Predicated region
      $region45: #{tpu_custom_call.1} parent=5 // pred_check
        %p320 = pneg %p319
      $region46: #{tpu_custom_call.1} parent=5 // pred_check_branch
        %322 = sbr.rel (%p320) target = $region48
      $region47: #{tpu_custom_call.1} parent=5 // pred_region
        _
      $region48: #{tpu_custom_call.1} parent=5 // pred_fallthru
        _
      %p323 = scmp.le.s32.totalorder 1, %s17
      %p324 = scmp.lt.s32.totalorder %s17, 3
      %p325 = pnand %p323, %p324
      %p326 = pneg %p325
      // Predicated region
      $region49: #{tpu_custom_call.1} parent=5 // pred_check
        _
      $region50: #{tpu_custom_call.1} parent=5 // pred_check_branch
        %328 = sbr.rel (%p325) target = $region52
      $region51: #{tpu_custom_call.1} parent=5 // pred_region
        %s329 = ssub.s32 %s17, 1
        // Predicated region
        $region53: #{tpu_custom_call.1} parent=51 // pred_check
          %p330 = pneg %p113
        $region54: #{tpu_custom_call.1} parent=51 // pred_check_branch
          %332 = sbr.rel (%p330) target = $region56
        $region55: #{tpu_custom_call.1} parent=51 // pred_region
          %334 = dma.done [#allocation4], 128
        $region56: #{tpu_custom_call.1} parent=51 // pred_fallthru
          _
        // Predicated region
        $region57: #{tpu_custom_call.1} parent=51 // pred_check
          %p335 = pneg %p134
        $region58: #{tpu_custom_call.1} parent=51 // pred_check_branch
          %337 = sbr.rel (%p335) target = $region60
        $region59: #{tpu_custom_call.1} parent=51 // pred_region
          %339 = dma.done [#allocation7], 64
        $region60: #{tpu_custom_call.1} parent=51 // pred_fallthru
          _
        %s340 = smul.u32 2, %s27
        %p341 = scmp.lt.s32.totalorder %s340, 1
        %s342 = scalar_select %p341, %s340, 1
        %p343 = scmp.lt.s32.totalorder %s29, 0
        %s344 = scalar_select %p343, %s29, 0
        %s345 = sadd.s32 %s344, %s342
        %s346 = smul.addr %s345, 8
        %s347 = scalar_lea.vmem %s0, %s346
        %p348 = pneg %p64
        %p349 = pneg %p61
        %s350 = smul.u32 2, %s27
        %p351 = scmp.lt.s32.totalorder %s350, 1
        %s352 = scalar_select %p351, %s350, 1
        %p353 = scmp.lt.s32.totalorder %s29, 0
        %s354 = scalar_select %p353, %s29, 0
        %s355 = sadd.s32 %s354, %s352
        %s356 = smul.addr %s355, 8
        %s357 = scalar_lea.vmem %s1, %s356
        %p358 = pneg %p92
        %p359 = pneg %p89
        %p360 = pneg %p113
        %p361 = pneg %p110
        %p362 = pneg %p134
        %p363 = pneg %p131
        %p364 = pneg %p155
        %p365 = pneg %p152
        %p366 = pneg %p176
        %p367 = pneg %p173
        %p368 = pneg %p197
        %p369 = pneg %p194
        %p370 = pneg %p218
        %p371 = pneg %p215
        %p372 = pneg %p244
        %p373 = pneg %p241
        %s374 = smul.u32 2, %s27
        %p375 = scmp.lt.s32.totalorder %s374, 1
        %s376 = scalar_select %p375, %s374, 1
        %p377 = scmp.lt.s32.totalorder %s29, 0
        %s378 = scalar_select %p377, %s29, 0
        %s379 = sadd.s32 %s378, %s376
        %s380 = smul.addr %s379, 8
        %s381 = scalar_lea.vmem %s0, %s380
        %s382 = smul.u32 2, %s27
        %s383 = smul.u32 2, %s27
        %p384 = scmp.lt.s32.totalorder %s383, 1
        %s385 = scalar_select %p384, %s383, 1
        %p386 = scmp.lt.s32.totalorder %s29, 0
        %s387 = scalar_select %p386, %s29, 0
        %s388 = sadd.s32 %s387, %s385
        %s389 = smul.addr %s388, 8
        %s390 = scalar_lea.vmem %s1, %s389
        %s391 = smul.u32 2, %s27
        %s392 = smul.u32 2, %s27
        %v393 = vld [vmem:[%s381] sm:$0xff]
        %v394 = vld [vmem:[%s381 + $0x8] sm:$0xff]
        %v395 = vld [vmem:[%s390] sm:$0xff]
        %v396 = vld [vmem:[%s390 + $0x8] sm:$0xff]
        %vm397 = vcmp.gt.f32.partialorder %v395, 0.5
        %vm398 = vcmp.gt.f32.partialorder %v396, 0.5
        %400 = vset.pattern.permute.xlu0 7
        %401 = vperm.xlu0 %400, %v395
        %v402 = vpop.permute.xlu0 %401
        %405 = vset.pattern.permute.xlu0 7
        %406 = vperm.xlu0 %405, %v396
        %v407 = vpop.permute.xlu0 %406
        %v409 = vmul.f32 %v393, %v402
        %v410 = vmul.f32 %v394, %v407
        %p411 = scmp.eq.s32.totalorder %s28, 0
        // Predicated region
        $region61: #{tpu_custom_call.1} parent=51 // pred_check
          %p412 = pneg %p411
        $region62: #{tpu_custom_call.1} parent=51 // pred_check_branch
          %414 = sbr.rel (%p412) target = $region64
        $region63: #{tpu_custom_call.1} parent=51 // pred_region
          %p415 = scmp.eq.s32.totalorder %s29, 0
          // Predicated region
          $region65: #{tpu_custom_call.1} parent=63 // pred_check
            %p416 = pneg %p415
          $region66: #{tpu_custom_call.1} parent=63 // pred_check_branch
            %418 = sbr.rel (%p416) target = $region68
          $region67: #{tpu_custom_call.1} parent=63 // pred_region
            %vm419 = vcmask 253952
            %420 = vst.msk [vmem:[#allocation2] sm:$0x1] %vm419, -inf
            %421 = vst.msk [vmem:[#allocation2 + $0x1] sm:$0x1] %vm419, -inf
          $region68: #{tpu_custom_call.1} parent=63 // pred_fallthru
            _
          %v422 = vsel %vm397, 1, 0
          %v423 = vsel %vm398, 1, 0
          %424 = vset.pattern.permute.xlu0 6
          %425 = vperm.xlu0 %424, %v422
          %v426 = vpop.permute.xlu0 %425
          %427 = vset.pattern.permute.xlu0 6
          %428 = vperm.xlu0 %427, %v423
          %v429 = vpop.permute.xlu0 %428
          %vm430 = vcmp.eq.s32.totalorder %v426, 1
          %vm431 = vcmp.eq.s32.totalorder %v429, 1
          %v432 = vsel %vm430, %v409, -inf
          %v433 = vsel %vm431, %v410, -inf
          %vm434 = vcmask 261120
          %v435 = vsel %vm434, %v432, -inf
          %v436 = vrot.slane %v435, 4
          %v437 = vmax.f32 %v435, %v436
          %v438 = vrot.slane %v437, 2
          %v439 = vmax.f32 %v437, %v438
          %v440 = vrot.slane %v439, 1
          %v441 = vmax.f32 %v439, %v440
          %v442 = vsel %vm434, %v433, -inf
          %v443 = vrot.slane %v442, 4
          %v444 = vmax.f32 %v442, %v443
          %v445 = vrot.slane %v444, 2
          %v446 = vmax.f32 %v444, %v445
          %v447 = vrot.slane %v446, 1
          %v448 = vmax.f32 %v446, %v447
          %v449 = vld [vmem:[#allocation2] sm:$0x1]
          %v450 = vld [vmem:[#allocation2 + $0x1] sm:$0x1]
          %v451 = vmax.f32 %v449, %v441
          %v452 = vmax.f32 %v450, %v448
          %vm453 = vcmask 253952
          %454 = vst.msk [vmem:[#allocation2] sm:$0x1] %vm453, %v451
          %455 = vst.msk [vmem:[#allocation2 + $0x1] sm:$0x1] %vm453, %v452
        $region64: #{tpu_custom_call.1} parent=51 // pred_fallthru
          _
        %p456 = scmp.eq.s32.totalorder %s28, 1
        // Predicated region
        $region69: #{tpu_custom_call.1} parent=51 // pred_check
          %p457 = pneg %p456
        $region70: #{tpu_custom_call.1} parent=51 // pred_check_branch
          %459 = sbr.rel (%p457) target = $region72
        $region71: #{tpu_custom_call.1} parent=51 // pred_region
          %v460 = vld [vmem:[#allocation3] sm:$0xff]
          %v461 = vld [vmem:[#allocation6] sm:$0xf]
          %v462 = vld [vmem:[%s4] sm:$0xff]
          %v463 = vld [vmem:[%s4 + $0x8] sm:$0xff]
          %v464 = vld [vmem:[%s4 + $0x10] sm:$0xff]
          %v465 = vld [vmem:[%s4 + $0x18] sm:$0xff]
          %v466 = vld [vmem:[%s4 + $0x20] sm:$0xff]
          %v467 = vld [vmem:[%s4 + $0x28] sm:$0xff]
          %v468 = vld [vmem:[%s4 + $0x30] sm:$0xff]
          %v469 = vld [vmem:[%s4 + $0x38] sm:$0xff]
          %vm470 = vcmask 261120
          %v471 = vsel %vm470, %v409, 0.0
          %472 = vadd.xlane.f32.xlu0 %v471
          %v473 = vpop.xlane.xlu0 %472
          %v474 = vsel %vm470, %v410, 0.0
          %475 = vadd.xlane.f32.xlu0 %v474
          %v476 = vpop.xlane.xlu0 %475
          %v477 = vrcp.pop 32.0
          %v478 = vmul.f32 32.0, %v477
          %v479 = vsub.f32 1.0, %v478
          %v480 = vmul.f32 %v477, %v479
          %v481 = vadd.f32 %v477, %v480
          %vm482 = vweird.f32 %v477
          %v483 = vsel %vm482, %v477, %v481
          %v484 = vmul.f32 %v473, %v483
          %v485 = vmul.f32 %v476, %v483
          %v486 = vmul.f32 %v409, %v409
          %v487 = vmul.f32 %v410, %v410
          %v488 = vsel %vm470, %v486, 0.0
          %489 = vadd.xlane.f32.xlu0 %v488
          %v490 = vpop.xlane.xlu0 %489
          %v491 = vsel %vm470, %v487, 0.0
          %492 = vadd.xlane.f32.xlu0 %v491
          %v493 = vpop.xlane.xlu0 %492
          %v494 = vmul.f32 %v490, %v483
          %v495 = vmul.f32 %v493, %v483
          %v496 = vmul.f32 %v484, %v484
          %v497 = vmul.f32 %v485, %v485
          %v498 = vsub.f32 %v494, %v496
          %v499 = vsub.f32 %v495, %v497
          %v500 = vsub.f32 %v409, %v484
          %v501 = vsub.f32 %v410, %v485
          %v502 = vadd.f32 %v498, 1e-05
          %v503 = vadd.f32 %v499, 1e-05
          %v504 = vrsqrt.pop %v502
          %v505 = vmul.f32 %v504, %v502
          %v506 = vmul.f32 %v505, %v504
          %v507 = vmul.f32 0.5, %v506
          %v508 = vsub.f32 1.5, %v507
          %v509 = vmul.f32 %v504, %v508
          %vm510 = vweird.f32 %v502
          %vm511 = vweird.f32 %v504
          %vm512 = vmor %vm510, %vm511
          %v513 = vsel %vm512, %v504, %v509
          %v514 = vrsqrt.pop %v503
          %v515 = vmul.f32 %v514, %v503
          %v516 = vmul.f32 %v515, %v514
          %v517 = vmul.f32 0.5, %v516
          %v518 = vsub.f32 1.5, %v517
          %v519 = vmul.f32 %v514, %v518
          %vm520 = vweird.f32 %v503
          %vm521 = vweird.f32 %v514
          %vm522 = vmor %vm520, %vm521
          %v523 = vsel %vm522, %v514, %v519
          %v524 = vmul.f32 %v500, %v513
          %v525 = vmul.f32 %v501, %v523
          %v526 = vperm.slane %v460, 0
          %v527 = vmul.f32 %v524, %v526
          %v528 = vmul.f32 %v525, %v526
          %v529 = vperm.slane %v460, 1
          %v530 = vadd.f32 %v527, %v529
          %v531 = vadd.f32 %v528, %v529
          %532 = vset.pattern.permute.xlu0 0
          %533 = vperm.xlu0 %532, %v395
          %v534 = vpop.permute.xlu0 %533
          %536 = vset.pattern.permute.xlu0 0
          %537 = vperm.xlu0 %536, %v396
          %v538 = vpop.permute.xlu0 %537
          %v540 = vperm.slane %v461, 0
          %v541 = vmul.f32 %v534, %v540
          %v542 = vmul.f32 %v538, %v540
          %543 = vset.pattern.permute.xlu0 1
          %544 = vperm.xlu0 %543, %v395
          %v545 = vpop.permute.xlu0 %544
          %547 = vset.pattern.permute.xlu0 1
          %548 = vperm.xlu0 %547, %v396
          %v549 = vpop.permute.xlu0 %548
          %v551 = vperm.slane %v461, 1
          %v552 = vmul.f32 %v545, %v551
          %v553 = vmul.f32 %v549, %v551
          %v554 = vadd.f32 %v541, %v552
          %v555 = vadd.f32 %v542, %v553
          %556 = vset.pattern.permute.xlu0 2
          %557 = vperm.xlu0 %556, %v395
          %v558 = vpop.permute.xlu0 %557
          %560 = vset.pattern.permute.xlu0 2
          %561 = vperm.xlu0 %560, %v396
          %v562 = vpop.permute.xlu0 %561
          %v564 = vperm.slane %v461, 2
          %v565 = vmul.f32 %v558, %v564
          %v566 = vmul.f32 %v562, %v564
          %v567 = vadd.f32 %v554, %v565
          %v568 = vadd.f32 %v555, %v566
          %v569 = vperm.slane %v461, 3
          %v570 = vadd.f32 %v567, %v569
          %v571 = vadd.f32 %v568, %v569
          %v572 = vmax.f32 %v570, 0.0
          %v573 = vmax.f32 %v571, 0.0
          %v574 = vperm.slane %v460, 2
          %vm575 = vcmask 523264
          %v577 = vsel %vm575, %v572, 0
          %v580 = vsel %vm575, %v573, 0
          %582 = vmatpush.msra.mxu0 0.0
          %583 = vmatpush.msra.mxu0 0.0
          %584 = vmatpush.msra.mxu0 0.0
          %585 = vmatpush.msra.mxu0 0.0
          %586 = vmatpush.msra.mxu0 0.0
          %587 = vmatpush.msra.mxu0 0.0
          %588 = vmatpush.msra.mxu0 0.0
          %589 = vmatpush.msra.mxu0 0.0
          %590 = vmatpush.msra.mxu0 %v469
          %591 = vmatpush.msra.mxu0 %v468
          %592 = vmatpush.msra.mxu0 %v467
          %593 = vmatpush.msra.mxu0 %v466
          %594 = vmatpush.msra.mxu0 %v465
          %595 = vmatpush.msra.mxu0 %v464
          %596 = vmatpush.msra.mxu0 %v463
          %597 = vmatpush.msra.mxu0 %v462
          %598 = vmatmul.f32.gmra.mxu0 %v577
          %v599 = vpop.f32.mrf.mxu0
          %v600 = vadd.f32 %v574, %v599
          %601 = vmatmul.f32.gmra.mxu0 %v580
          %v602 = vpop.f32.mrf.mxu0
          %v603 = vadd.f32 %v574, %v602
          %604 = vdwg.mxu0
          %v605 = vsel %vm470, %v600, 0.0
          %606 = vadd.xlane.f32.xlu0 %v605
          %v607 = vpop.xlane.xlu0 %606
          %v608 = vsel %vm470, %v603, 0.0
          %609 = vadd.xlane.f32.xlu0 %v608
          %v610 = vpop.xlane.xlu0 %609
          %v611 = vmul.f32 %v607, %v483
          %v612 = vmul.f32 %v610, %v483
          %v613 = vmul.f32 %v600, %v600
          %v614 = vmul.f32 %v603, %v603
          %v615 = vsel %vm470, %v613, 0.0
          %616 = vadd.xlane.f32.xlu0 %v615
          %v617 = vpop.xlane.xlu0 %616
          %v618 = vsel %vm470, %v614, 0.0
          %619 = vadd.xlane.f32.xlu0 %v618
          %v620 = vpop.xlane.xlu0 %619
          %v621 = vmul.f32 %v617, %v483
          %v622 = vmul.f32 %v620, %v483
          %v623 = vmul.f32 %v611, %v611
          %v624 = vmul.f32 %v612, %v612
          %v625 = vsub.f32 %v621, %v623
          %v626 = vsub.f32 %v622, %v624
          %v627 = vsub.f32 %v600, %v611
          %v628 = vsub.f32 %v603, %v612
          %v629 = vadd.f32 %v625, 1e-05
          %v630 = vadd.f32 %v626, 1e-05
          %v631 = vrsqrt.pop %v629
          %v632 = vmul.f32 %v631, %v629
          %v633 = vmul.f32 %v632, %v631
          %v634 = vmul.f32 0.5, %v633
          %v635 = vsub.f32 1.5, %v634
          %v636 = vmul.f32 %v631, %v635
          %vm637 = vweird.f32 %v629
          %vm638 = vweird.f32 %v631
          %vm639 = vmor %vm637, %vm638
          %v640 = vsel %vm639, %v631, %v636
          %v641 = vrsqrt.pop %v630
          %v642 = vmul.f32 %v641, %v630
          %v643 = vmul.f32 %v642, %v641
          %v644 = vmul.f32 0.5, %v643
          %v645 = vsub.f32 1.5, %v644
          %v646 = vmul.f32 %v641, %v645
          %vm647 = vweird.f32 %v630
          %vm648 = vweird.f32 %v641
          %vm649 = vmor %vm647, %vm648
          %v650 = vsel %vm649, %v641, %v646
          %v651 = vmul.f32 %v627, %v640
          %v652 = vmul.f32 %v628, %v650
          %v653 = vperm.slane %v460, 3
          %v654 = vmul.f32 %v651, %v653
          %v655 = vmul.f32 %v652, %v653
          %v656 = vperm.slane %v460, 4
          %v657 = vadd.f32 %v654, %v656
          %v658 = vadd.f32 %v655, %v656
          %659 = vset.pattern.permute.xlu0 3
          %660 = vperm.xlu0 %659, %v395
          %v661 = vpop.permute.xlu0 %660
          %663 = vset.pattern.permute.xlu0 3
          %664 = vperm.xlu0 %663, %v396
          %v665 = vpop.permute.xlu0 %664
          %v667 = vmul.f32 %v661, %v540
          %v668 = vmul.f32 %v665, %v540
          %669 = vset.pattern.permute.xlu0 4
          %670 = vperm.xlu0 %669, %v395
          %v671 = vpop.permute.xlu0 %670
          %673 = vset.pattern.permute.xlu0 4
          %674 = vperm.xlu0 %673, %v396
          %v675 = vpop.permute.xlu0 %674
          %v677 = vmul.f32 %v671, %v551
          %v678 = vmul.f32 %v675, %v551
          %v679 = vadd.f32 %v667, %v677
          %v680 = vadd.f32 %v668, %v678
          %681 = vset.pattern.permute.xlu0 5
          %682 = vperm.xlu0 %681, %v395
          %v683 = vpop.permute.xlu0 %682
          %685 = vset.pattern.permute.xlu0 5
          %686 = vperm.xlu0 %685, %v396
          %v687 = vpop.permute.xlu0 %686
          %v689 = vmul.f32 %v683, %v564
          %v690 = vmul.f32 %v687, %v564
          %v691 = vadd.f32 %v679, %v689
          %v692 = vadd.f32 %v680, %v690
          %v693 = vadd.f32 %v691, %v569
          %v694 = vadd.f32 %v692, %v569
          %v695 = vmax.f32 %v693, 0.0
          %v696 = vmax.f32 %v694, 0.0
          %v698 = vsel %vm575, %v695, 0
          %v701 = vsel %vm575, %v696, 0
          %703 = vmatpush.msra.mxu0 0.0
          %704 = vmatpush.msra.mxu0 0.0
          %705 = vmatpush.msra.mxu0 0.0
          %706 = vmatpush.msra.mxu0 0.0
          %707 = vmatpush.msra.mxu0 0.0
          %708 = vmatpush.msra.mxu0 0.0
          %709 = vmatpush.msra.mxu0 0.0
          %710 = vmatpush.msra.mxu0 0.0
          %711 = vmatpush.msra.mxu0 %v469
          %712 = vmatpush.msra.mxu0 %v468
          %713 = vmatpush.msra.mxu0 %v467
          %714 = vmatpush.msra.mxu0 %v466
          %715 = vmatpush.msra.mxu0 %v465
          %716 = vmatpush.msra.mxu0 %v464
          %717 = vmatpush.msra.mxu0 %v463
          %718 = vmatpush.msra.mxu0 %v462
          %719 = vmatmul.f32.gmra.mxu0 %v698
          %v720 = vpop.f32.mrf.mxu0
          %v721 = vadd.f32 %v574, %v720
          %722 = vmatmul.f32.gmra.mxu0 %v701
          %v723 = vpop.f32.mrf.mxu0
          %v724 = vadd.f32 %v574, %v723
          %725 = vdwg.mxu0
          %v726 = vsel %vm470, %v721, 0.0
          %727 = vadd.xlane.f32.xlu0 %v726
          %v728 = vpop.xlane.xlu0 %727
          %v729 = vsel %vm470, %v724, 0.0
          %730 = vadd.xlane.f32.xlu0 %v729
          %v731 = vpop.xlane.xlu0 %730
          %v732 = vmul.f32 %v728, %v483
          %v733 = vmul.f32 %v731, %v483
          %v734 = vmul.f32 %v721, %v721
          %v735 = vmul.f32 %v724, %v724
          %v736 = vsel %vm470, %v734, 0.0
          %737 = vadd.xlane.f32.xlu0 %v736
          %v738 = vpop.xlane.xlu0 %737
          %v739 = vsel %vm470, %v735, 0.0
          %740 = vadd.xlane.f32.xlu0 %v739
          %v741 = vpop.xlane.xlu0 %740
          %v742 = vmul.f32 %v738, %v483
          %v743 = vmul.f32 %v741, %v483
          %v744 = vmul.f32 %v732, %v732
          %v745 = vmul.f32 %v733, %v733
          %v746 = vsub.f32 %v742, %v744
          %v747 = vsub.f32 %v743, %v745
          %v748 = vsub.f32 %v721, %v732
          %v749 = vsub.f32 %v724, %v733
          %v750 = vadd.f32 %v746, 1e-05
          %v751 = vadd.f32 %v747, 1e-05
          %v752 = vrsqrt.pop %v750
          %v753 = vmul.f32 %v752, %v750
          %v754 = vmul.f32 %v753, %v752
          %v755 = vmul.f32 0.5, %v754
          %v756 = vsub.f32 1.5, %v755
          %v757 = vmul.f32 %v752, %v756
          %vm758 = vweird.f32 %v750
          %vm759 = vweird.f32 %v752
          %vm760 = vmor %vm758, %vm759
          %v761 = vsel %vm760, %v752, %v757
          %v762 = vrsqrt.pop %v751
          %v763 = vmul.f32 %v762, %v751
          %v764 = vmul.f32 %v763, %v762
          %v765 = vmul.f32 0.5, %v764
          %v766 = vsub.f32 1.5, %v765
          %v767 = vmul.f32 %v762, %v766
          %vm768 = vweird.f32 %v751
          %vm769 = vweird.f32 %v762
          %vm770 = vmor %vm768, %vm769
          %v771 = vsel %vm770, %v762, %v767
          %v772 = vmul.f32 %v748, %v761
          %v773 = vmul.f32 %v749, %v771
          %v774 = vmul.f32 %v772, %v653
          %v775 = vmul.f32 %v773, %v653
          %v776 = vadd.f32 %v774, %v656
          %v777 = vadd.f32 %v775, %v656
          %v778 = vadd.f32 %v657, %v776
          %v779 = vadd.f32 %v658, %v777
          %v780 = vld [vmem:[#allocation2] sm:$0x1]
          %v781 = vld [vmem:[#allocation2 + $0x1] sm:$0x1]
          %v784 = vperm.slane %v780, 0
          %v785 = vperm.slane %v781, 0
          %v788 = vadd.f32 %v778, %v784
          %v789 = vadd.f32 %v779, %v785
          %v790 = vld [vmem:[%s5] sm:$0xff]
          %v791 = vld [vmem:[%s5 + $0x8] sm:$0xff]
          %v792 = vld [vmem:[%s5 + $0x10] sm:$0xff]
          %v793 = vld [vmem:[%s5 + $0x18] sm:$0xff]
          %v794 = vld [vmem:[%s6] sm:$0xff]
          %v795 = vld [vmem:[%s6 + $0x8] sm:$0xff]
          %v796 = vld [vmem:[%s6 + $0x10] sm:$0xff]
          %v797 = vld [vmem:[%s6 + $0x18] sm:$0xff]
          %v799 = vsel %vm470, %v788, 0
          %v802 = vsel %vm470, %v789, 0
          %804 = vmatpush.msra.mxu0 0.0
          %805 = vmatpush.msra.mxu0 0.0
          %806 = vmatpush.msra.mxu0 0.0
          %807 = vmatpush.msra.mxu0 0.0
          %808 = vmatpush.msra.mxu0 0.0
          %809 = vmatpush.msra.mxu0 0.0
          %810 = vmatpush.msra.mxu0 0.0
          %811 = vmatpush.msra.mxu0 0.0
          %812 = vmatpush.msra.mxu0 0.0
          %813 = vmatpush.msra.mxu0 0.0
          %814 = vmatpush.msra.mxu0 0.0
          %815 = vmatpush.msra.mxu0 0.0
          %816 = vmatpush.msra.mxu0 %v797
          %817 = vmatpush.msra.mxu0 %v796
          %818 = vmatpush.msra.mxu0 %v795
          %819 = vmatpush.msra.mxu0 %v794
          %820 = vmatmul.f32.gmra.mxu0 %v799
          %v821 = vpop.f32.mrf.mxu0
          %v822 = vadd.f32 0.0, %v821
          %823 = vmatmul.f32.gmra.mxu0 %v802
          %v824 = vpop.f32.mrf.mxu0
          %v825 = vadd.f32 0.0, %v824
          %826 = vdwg.mxu0
          %v828 = vsel %vm470, %v530, 0
          %v831 = vsel %vm470, %v531, 0
          %833 = vmatpush.msra.mxu0 0.0
          %834 = vmatpush.msra.mxu0 0.0
          %835 = vmatpush.msra.mxu0 0.0
          %836 = vmatpush.msra.mxu0 0.0
          %837 = vmatpush.msra.mxu0 0.0
          %838 = vmatpush.msra.mxu0 0.0
          %839 = vmatpush.msra.mxu0 0.0
          %840 = vmatpush.msra.mxu0 0.0
          %841 = vmatpush.msra.mxu0 0.0
          %842 = vmatpush.msra.mxu0 0.0
          %843 = vmatpush.msra.mxu0 0.0
          %844 = vmatpush.msra.mxu0 0.0
          %845 = vmatpush.msra.mxu0 %v793
          %846 = vmatpush.msra.mxu0 %v792
          %847 = vmatpush.msra.mxu0 %v791
          %848 = vmatpush.msra.mxu0 %v790
          %849 = vmatmul.f32.gmra.mxu0 %v828
          %v850 = vpop.f32.mrf.mxu0
          %v851 = vadd.f32 %v822, %v850
          %852 = vmatmul.f32.gmra.mxu0 %v831
          %v853 = vpop.f32.mrf.mxu0
          %v854 = vadd.f32 %v825, %v853
          %855 = vdwg.mxu0
          %v856 = vld [vmem:[%s7] sm:$0x1]
          %v858 = vperm.slane %v856, 0
          %v860 = vadd.f32 %v851, %v858
          %v861 = vadd.f32 %v854, %v858
          %v862 = vmul.f32 %v860, %v530
          %v863 = vmul.f32 %v861, %v531
          %866 = vrot.lane.b32.xlu0 %v860, 96
          %v867 = vpop.permute.xlu0 %866
          %868 = vrot.lane.b32.xlu0 %v861, 96
          %v869 = vpop.permute.xlu0 %868
          %v872 = vadd.f32 %v862, %v867
          %v873 = vadd.f32 %v863, %v869
          %v874 = vsel %vm397, 1, 0
          %v875 = vsel %vm398, 1, 0
          %876 = vset.pattern.permute.xlu0 6
          %877 = vperm.xlu0 %876, %v874
          %v878 = vpop.permute.xlu0 %877
          %879 = vset.pattern.permute.xlu0 6
          %880 = vperm.xlu0 %879, %v875
          %v881 = vpop.permute.xlu0 %880
          %vm882 = vcmp.eq.s32.totalorder %v878, 1
          %vm883 = vcmp.eq.s32.totalorder %v881, 1
          %v884 = vsel %vm882, %v872, -inf
          %v885 = vsel %vm883, %v873, -inf
          %v886 = vsel %vm470, %v884, -inf
          %v887 = vrot.slane %v886, 4
          %v888 = vmax.f32 %v886, %v887
          %v889 = vrot.slane %v888, 2
          %v890 = vmax.f32 %v888, %v889
          %v891 = vrot.slane %v890, 1
          %v892 = vmax.f32 %v890, %v891
          %v893 = vsel %vm470, %v885, -inf
          %v894 = vrot.slane %v893, 4
          %v895 = vmax.f32 %v893, %v894
          %v896 = vrot.slane %v895, 2
          %v897 = vmax.f32 %v895, %v896
          %v898 = vrot.slane %v897, 1
          %v899 = vmax.f32 %v897, %v898
          %p900 = scmp.eq.s32.totalorder %s29, 0
          // Predicated region
          $region73: #{tpu_custom_call.1} parent=71 // pred_check
            %p901 = pneg %p900
          $region74: #{tpu_custom_call.1} parent=71 // pred_check_branch
            %903 = sbr.rel (%p901) target = $region76
          $region75: #{tpu_custom_call.1} parent=71 // pred_region
            %vm904 = vcmask 253952
            %905 = vst.msk [vmem:[#allocation8] sm:$0x1] %vm904, %v892
            %906 = vst.msk [vmem:[#allocation8 + $0x1] sm:$0x1] %vm904, %v899
          $region76: #{tpu_custom_call.1} parent=71 // pred_fallthru
            _
          %p907 = scmp.ne.s32.totalorder %s29, 0
          // Predicated region
          $region77: #{tpu_custom_call.1} parent=71 // pred_check
            %p908 = pneg %p907
          $region78: #{tpu_custom_call.1} parent=71 // pred_check_branch
            %910 = sbr.rel (%p908) target = $region80
          $region79: #{tpu_custom_call.1} parent=71 // pred_region
            %v911 = vld [vmem:[#allocation8] sm:$0x1]
            %v912 = vld [vmem:[#allocation8 + $0x1] sm:$0x1]
            %v913 = vmax.f32 %v911, %v892
            %v914 = vmax.f32 %v912, %v899
            %vm915 = vcmask 253952
            %916 = vst.msk [vmem:[#allocation8] sm:$0x1] %vm915, %v913
            %917 = vst.msk [vmem:[#allocation8 + $0x1] sm:$0x1] %vm915, %v914
          $region80: #{tpu_custom_call.1} parent=71 // pred_fallthru
            _
        $region72: #{tpu_custom_call.1} parent=51 // pred_fallthru
          _
        // Predicated region
        $region81: #{tpu_custom_call.1} parent=51 // pred_check
          %p918 = pneg %p241
        $region82: #{tpu_custom_call.1} parent=51 // pred_check_branch
          %920 = sbr.rel (%p918) target = $region84
        $region83: #{tpu_custom_call.1} parent=51 // pred_region
          %s921 = smul.u32 2, %s27
          %923 = vsyncadd [#allocation5], 0
          %s924 = scalar_lea.hbm %s8, %s921
          %s925 = sshll.u32 [#allocation8], 4
          %s926 = int_to_ptr.vmem [resolvable:$true] %s925
          %s927 = sshll.u32 %s924, 4
          %s928 = int_to_ptr.hbm [resolvable:$true] %s927
          %933 = dma.vmem_to_hbm [thread:$0]  %s926, 32, %s928, [#allocation5], 16, 16, 1
        $region84: #{tpu_custom_call.1} parent=51 // pred_fallthru
          _
        // Predicated region
        $region85: #{tpu_custom_call.1} parent=51 // pred_check
          %p934 = pneg %p241
        $region86: #{tpu_custom_call.1} parent=51 // pred_check_branch
          %936 = sbr.rel (%p934) target = $region88
        $region87: #{tpu_custom_call.1} parent=51 // pred_region
          %938 = dma.done [#allocation5], 32
        $region88: #{tpu_custom_call.1} parent=51 // pred_fallthru
          _
      $region52: #{tpu_custom_call.1} parent=5 // pred_fallthru
        _
      %p939 = scmp.le.s32.totalorder 2, %s17
      // Predicated region
      $region89: #{tpu_custom_call.1} parent=5 // pred_check
        %p940 = pneg %p939
      $region90: #{tpu_custom_call.1} parent=5 // pred_check_branch
        %942 = sbr.rel (%p940) target = $region92
      $region91: #{tpu_custom_call.1} parent=5 // pred_region
        %s943 = ssub.s32 %s17, 2
      $region92: #{tpu_custom_call.1} parent=5 // pred_fallthru
        _
    $region6: #{tpu_custom_call.1} parent=1 // loop_footer
      %s21 = sadd.s32 1, %s17
    $region7: #{tpu_custom_call.1} parent=1 // loop_footer_branch
      %16 = sbr.rel target = $region3
    $region8: #{tpu_custom_call.1} parent=1 // loop_exit
      _
    %944 = vsyncpa [#allocation4], 1
    %s945 = scalar_lea.sflag [#allocation4], 1
    %946 = vsyncpa %s945, 1
    %947 = vsyncpa [#allocation7], 1
    %948 = vsyncpa [#allocation5], 1
    %s949 = scalar_lea.sflag [#allocation5], 1
    %950 = vsyncpa %s949, 1

// kernel: tpu_custom_call.1
$region0: #{tpu_custom_call.1}
  #allocation0 [shape = 'u32[]', space=smem, size = 0x4, offset = 0x4, fixed_abs, tag = 'smem constant byte address 0x4 - core index']
  #allocation1 [shape = 'u32[72,128]{1,0:T(1,128)}', space=vmem, size = 0x9000, scoped, tag = 'internal scratch']
  #allocation2 [shape = 'f32[2,1,32]{2,1,0:T(1,128)}', space=vmem, size = 0x400, scoped, tag = 'scratch operand']
  %s0 = inlined_call_operand.vmem [shape: f32[2,8,32], index: 0, kind: input, shape index: {}]
  %s1 = inlined_call_operand.vmem [shape: f32[2,8,8], index: 1, kind: input, shape index: {}]
  %s2 = inlined_call_operand.hbm [shape: f32[8,32], index: 2, kind: input, shape index: {}]
  %s3 = inlined_call_operand.hbm [shape: f32[4,64], index: 3, kind: input, shape index: {}]
  %s4 = inlined_call_operand.vmem [shape: f32[64,32], index: 4, kind: input, shape index: {}]
  %s5 = inlined_call_operand.vmem [shape: f32[32,64], index: 5, kind: input, shape index: {}]
  %s6 = inlined_call_operand.vmem [shape: f32[32,64], index: 6, kind: input, shape index: {}]
  %s7 = inlined_call_operand.vmem [shape: f32[1,64], index: 7, kind: input, shape index: {}]
  %s8 = inlined_call_operand.hbm [shape: f32[2,1,32], index: 8, kind: output, shape index: {}]
  %s9 = sld [smem:[#allocation0]]
  $region93: #{tpu_custom_call.1} parent=0
    _
  %s11 = ssub.s32 1, %s9
  %s12 = scalar_select 0, %s11, %s9
  $region1: #{tpu_custom_call.1} parent=0
    #allocation3 [shape = 'u8[4096]{0}', space=vmem, size = 0x1000, scoped, tag = 'input window, operand 2, single buffered']
    #allocation4 [shape = 's32[2]{0}', space=sflag, size = 0x8, scoped, tag = 'scoped memory for tpu_custom_call.1']
    #allocation5 [shape = 's32[2]{0}', space=sflag, size = 0x8, scoped, tag = 'scoped memory for tpu_custom_call.1']
    #allocation6 [shape = 'u8[2048]{0}', space=vmem, size = 0x800, scoped, tag = 'input window, operand 3, single buffered']
    #allocation7 [shape = 's32[1]{0}', space=sflag, size = 0x4, scoped, tag = 'scoped memory for tpu_custom_call.1']
    #allocation8 [shape = 'u8[1024]{0}', space=vmem, size = 0x400, scoped, tag = 'output window, operand 0, single buffered']
    %13 = vsyncpa [#allocation4], 0
    %14 = vsyncpa [#allocation7], 0
    %15 = vsyncpa [#allocation5], 0
    loop: start=0, step=1, limit=4
    $region2: #{tpu_custom_call.1} parent=1 // loop_pre_header
      _
    $region3: #{tpu_custom_call.1} parent=1 // loop_header
      %s17 = sphi 0, %s21
      %p18 = scmp.ge.s32.totalorder %s17, 4
      %s24 = sphi 0, %s43
      %s25 = sphi 0, %s39
      %s26 = sphi 0, %s35
      %s27 = sphi 0, %s24
      %s28 = sphi 0, %s25
      %s29 = sphi 0, %s26
      %s30 = sphi 0, %s27
      %s31 = sphi 0, %s28
      %s32 = sphi 0, %s29
      %s48 = sphi 0, %s50
      %s51 = sphi 0, %s48
      %s52 = sphi 0, %s51
      %s68 = sphi 0, %s52
      %s76 = sphi 0, %s78
      %s79 = sphi 0, %s76
      %s80 = sphi 0, %s79
      %s96 = sphi 0, %s80
      %s100 = sphi 0, %s100
      %s102 = sphi 0, %s100
      %s103 = sphi 0, %s102
      %s117 = sphi 0, %s103
      %s121 = sphi 0, %s121
      %s123 = sphi 0, %s121
      %s124 = sphi 0, %s123
      %s138 = sphi 0, %s124
      %s142 = sphi 0, %s142
      %s144 = sphi 0, %s142
      %s145 = sphi 0, %s144
      %s159 = sphi 0, %s145
      %s163 = sphi 0, %s163
      %s165 = sphi 0, %s163
      %s166 = sphi 0, %s165
      %s180 = sphi 0, %s166
      %s184 = sphi 0, %s184
      %s186 = sphi 0, %s184
      %s187 = sphi 0, %s186
      %s201 = sphi 0, %s187
      %s205 = sphi 0, %s205
      %s207 = sphi 0, %s205
      %s208 = sphi 0, %s207
      %s222 = sphi 0, %s208
      %s228 = sphi 0, %s230
      %s231 = sphi 0, %s228
      %s232 = sphi 0, %s231
      %s248 = sphi 0, %s232
    $region4: #{tpu_custom_call.1} parent=1 // loop_header_branch
      %20 = sbr.rel (%p18) target = $region8
    $region5: #{tpu_custom_call.1} parent=1 // loop_body
      %s22 = ssub.s32 %s17, 1
      %s23 = ssub.s32 %s17, 2
      %s33 = sadd.s32 1, %s26
      %p34 = scmp.ge.s32.totalorder %s33, 1
      %s35 = scalar_select %p34, 0, %s33
      %s36 = sadd.s32 1, %s25
      %s37 = scalar_select %p34, %s36, %s25
      %p38 = scmp.ge.s32.totalorder %s37, 2
      %s39 = scalar_select %p38, 0, %s37
      %s40 = sadd.s32 1, %s24
      %s41 = scalar_select %p38, %s40, %s24
      %p42 = scmp.ge.s32.totalorder %s41, 1
      %s43 = scalar_select %p42, 0, %s41
      %s44 = ssub.s32 %s24, %s43
      %s45 = ssub.s32 %s26, %s35
      %s46 = sor.u32 %s44, %s45
      %p47 = scmp.eq.s32.totalorder %s46, 0
      %s49 = sadd.s32 %s48, 1
      %s50 = scalar_select %p47, %s48, %s49
      %p53 = pneg %p47
      %p54 = scmp.eq.s32.totalorder %s17, 1
      %p55 = por %p53, %p54
      %p56 = scmp.ne.s32.totalorder %s48, %s51
      %p57 = scmp.eq.s32.totalorder %s17, 0
      %p58 = por %p56, %p57
      %p59 = scmp.ne.s32.totalorder %s48, %s51
      %p60 = scmp.eq.s32.totalorder %s22, 1
      %p61 = por %p59, %p60
      %p62 = scmp.ne.s32.totalorder %s51, %s52
      %p63 = scmp.eq.s32.totalorder %s22, 0
      %p64 = por %p62, %p63
      %p65 = scmp.ne.s32.totalorder %s51, %s52
      %p66 = scmp.eq.s32.totalorder %s23, 1
      %p67 = por %p65, %p66
      %p69 = scmp.ne.s32.totalorder %s52, %s68
      %p70 = scmp.eq.s32.totalorder %s23, 0
      %p71 = por %p69, %p70
      %s72 = ssub.s32 %s24, %s43
      %s73 = ssub.s32 %s26, %s35
      %s74 = sor.u32 %s72, %s73
      %p75 = scmp.eq.s32.totalorder %s74, 0
      %s77 = sadd.s32 %s76, 1
      %s78 = scalar_select %p75, %s76, %s77
      %p81 = pneg %p75
      %p82 = scmp.eq.s32.totalorder %s17, 1
      %p83 = por %p81, %p82
      %p84 = scmp.ne.s32.totalorder %s76, %s79
      %p85 = scmp.eq.s32.totalorder %s17, 0
      %p86 = por %p84, %p85
      %p87 = scmp.ne.s32.totalorder %s76, %s79
      %p88 = scmp.eq.s32.totalorder %s22, 1
      %p89 = por %p87, %p88
      %p90 = scmp.ne.s32.totalorder %s79, %s80
      %p91 = scmp.eq.s32.totalorder %s22, 0
      %p92 = por %p90, %p91
      %p93 = scmp.ne.s32.totalorder %s79, %s80
      %p94 = scmp.eq.s32.totalorder %s23, 1
      %p95 = por %p93, %p94
      %p97 = scmp.ne.s32.totalorder %s80, %s96
      %p98 = scmp.eq.s32.totalorder %s23, 0
      %p99 = por %p97, %p98
      %s101 = sadd.s32 %s100, 1
      %p104 = scmp.eq.s32.totalorder %s17, 1
      %p105 = scmp.ne.s32.totalorder %s100, %s102
      %p106 = scmp.eq.s32.totalorder %s17, 0
      %p107 = por %p105, %p106
      %p108 = scmp.ne.s32.totalorder %s100, %s102
      %p109 = scmp.eq.s32.totalorder %s22, 1
      %p110 = por %p108, %p109
      %p111 = scmp.ne.s32.totalorder %s102, %s103
      %p112 = scmp.eq.s32.totalorder %s22, 0
      %p113 = por %p111, %p112
      %p114 = scmp.ne.s32.totalorder %s102, %s103
      %p115 = scmp.eq.s32.totalorder %s23, 1
      %p116 = por %p114, %p115
      %p118 = scmp.ne.s32.totalorder %s103, %s117
      %p119 = scmp.eq.s32.totalorder %s23, 0
      %p120 = por %p118, %p119
      %s122 = sadd.s32 %s121, 1
      %p125 = scmp.eq.s32.totalorder %s17, 1
      %p126 = scmp.ne.s32.totalorder %s121, %s123
      %p127 = scmp.eq.s32.totalorder %s17, 0
      %p128 = por %p126, %p127
      %p129 = scmp.ne.s32.totalorder %s121, %s123
      %p130 = scmp.eq.s32.totalorder %s22, 1
      %p131 = por %p129, %p130
      %p132 = scmp.ne.s32.totalorder %s123, %s124
      %p133 = scmp.eq.s32.totalorder %s22, 0
      %p134 = por %p132, %p133
      %p135 = scmp.ne.s32.totalorder %s123, %s124
      %p136 = scmp.eq.s32.totalorder %s23, 1
      %p137 = por %p135, %p136
      %p139 = scmp.ne.s32.totalorder %s124, %s138
      %p140 = scmp.eq.s32.totalorder %s23, 0
      %p141 = por %p139, %p140
      %s143 = sadd.s32 %s142, 1
      %p146 = scmp.eq.s32.totalorder %s17, 1
      %p147 = scmp.ne.s32.totalorder %s142, %s144
      %p148 = scmp.eq.s32.totalorder %s17, 0
      %p149 = por %p147, %p148
      %p150 = scmp.ne.s32.totalorder %s142, %s144
      %p151 = scmp.eq.s32.totalorder %s22, 1
      %p152 = por %p150, %p151
      %p153 = scmp.ne.s32.totalorder %s144, %s145
      %p154 = scmp.eq.s32.totalorder %s22, 0
      %p155 = por %p153, %p154
      %p156 = scmp.ne.s32.totalorder %s144, %s145
      %p157 = scmp.eq.s32.totalorder %s23, 1
      %p158 = por %p156, %p157
      %p160 = scmp.ne.s32.totalorder %s145, %s159
      %p161 = scmp.eq.s32.totalorder %s23, 0
      %p162 = por %p160, %p161
      %s164 = sadd.s32 %s163, 1
      %p167 = scmp.eq.s32.totalorder %s17, 1
      %p168 = scmp.ne.s32.totalorder %s163, %s165
      %p169 = scmp.eq.s32.totalorder %s17, 0
      %p170 = por %p168, %p169
      %p171 = scmp.ne.s32.totalorder %s163, %s165
      %p172 = scmp.eq.s32.totalorder %s22, 1
      %p173 = por %p171, %p172
      %p174 = scmp.ne.s32.totalorder %s165, %s166
      %p175 = scmp.eq.s32.totalorder %s22, 0
      %p176 = por %p174, %p175
      %p177 = scmp.ne.s32.totalorder %s165, %s166
      %p178 = scmp.eq.s32.totalorder %s23, 1
      %p179 = por %p177, %p178
      %p181 = scmp.ne.s32.totalorder %s166, %s180
      %p182 = scmp.eq.s32.totalorder %s23, 0
      %p183 = por %p181, %p182
      %s185 = sadd.s32 %s184, 1
      %p188 = scmp.eq.s32.totalorder %s17, 1
      %p189 = scmp.ne.s32.totalorder %s184, %s186
      %p190 = scmp.eq.s32.totalorder %s17, 0
      %p191 = por %p189, %p190
      %p192 = scmp.ne.s32.totalorder %s184, %s186
      %p193 = scmp.eq.s32.totalorder %s22, 1
      %p194 = por %p192, %p193
      %p195 = scmp.ne.s32.totalorder %s186, %s187
      %p196 = scmp.eq.s32.totalorder %s22, 0
      %p197 = por %p195, %p196
      %p198 = scmp.ne.s32.totalorder %s186, %s187
      %p199 = scmp.eq.s32.totalorder %s23, 1
      %p200 = por %p198, %p199
      %p202 = scmp.ne.s32.totalorder %s187, %s201
      %p203 = scmp.eq.s32.totalorder %s23, 0
      %p204 = por %p202, %p203
      %s206 = sadd.s32 %s205, 1
      %p209 = scmp.eq.s32.totalorder %s17, 1
      %p210 = scmp.ne.s32.totalorder %s205, %s207
      %p211 = scmp.eq.s32.totalorder %s17, 0
      %p212 = por %p210, %p211
      %p213 = scmp.ne.s32.totalorder %s205, %s207
      %p214 = scmp.eq.s32.totalorder %s22, 1
      %p215 = por %p213, %p214
      %p216 = scmp.ne.s32.totalorder %s207, %s208
      %p217 = scmp.eq.s32.totalorder %s22, 0
      %p218 = por %p216, %p217
      %p219 = scmp.ne.s32.totalorder %s207, %s208
      %p220 = scmp.eq.s32.totalorder %s23, 1
      %p221 = por %p219, %p220
      %p223 = scmp.ne.s32.totalorder %s208, %s222
      %p224 = scmp.eq.s32.totalorder %s23, 0
      %p225 = por %p223, %p224
      %s226 = ssub.s32 %s24, %s43
      %p227 = scmp.eq.s32.totalorder %s226, 0
      %s229 = sadd.s32 %s228, 1
      %s230 = scalar_select %p227, %s228, %s229
      %p233 = pneg %p227
      %p234 = scmp.eq.s32.totalorder %s17, 1
      %p235 = por %p233, %p234
      %p236 = scmp.ne.s32.totalorder %s228, %s231
      %p237 = scmp.eq.s32.totalorder %s17, 0
      %p238 = por %p236, %p237
      %p239 = scmp.ne.s32.totalorder %s228, %s231
      %p240 = scmp.eq.s32.totalorder %s22, 1
      %p241 = por %p239, %p240
      %p242 = scmp.ne.s32.totalorder %s231, %s232
      %p243 = scmp.eq.s32.totalorder %s22, 0
      %p244 = por %p242, %p243
      %p245 = scmp.ne.s32.totalorder %s231, %s232
      %p246 = scmp.eq.s32.totalorder %s23, 1
      %p247 = por %p245, %p246
      %p249 = scmp.ne.s32.totalorder %s232, %s248
      %p250 = scmp.eq.s32.totalorder %s23, 0
      %p251 = por %p249, %p250
      %p252 = scmp.le.s32.totalorder 1, %s17
      %p253 = scmp.lt.s32.totalorder %s17, 3
      %p254 = pnand %p252, %p253
      %p255 = pneg %p254
      // Predicated region
      $region9: #{tpu_custom_call.1} parent=5 // pred_check
        _
      $region10: #{tpu_custom_call.1} parent=5 // pred_check_branch
        %257 = sbr.rel (%p254) target = $region12
      $region11: #{tpu_custom_call.1} parent=5 // pred_region
        %s258 = ssub.s32 %s17, 1
        // Predicated region
        $region13: #{tpu_custom_call.1} parent=11 // pred_check
          %p259 = pneg %p64
        $region14: #{tpu_custom_call.1} parent=11 // pred_check_branch
          %261 = sbr.rel (%p259) target = $region16
        $region15: #{tpu_custom_call.1} parent=11 // pred_region
          %s262 = smul.u32 2, %s27
          %p263 = scmp.lt.s32.totalorder %s262, 1
          %s264 = scalar_select %p263, %s262, 1
          %p265 = scmp.lt.s32.totalorder %s29, 0
          %s266 = scalar_select %p265, %s29, 0
          %s267 = sadd.s32 %s266, %s264
          %s268 = smul.addr %s267, 8
          %s269 = scalar_lea.vmem %s0, %s268
          %s270 = smul.u32 2, %s27
        $region16: #{tpu_custom_call.1} parent=11 // pred_fallthru
          _
        // Predicated region
        $region17: #{tpu_custom_call.1} parent=11 // pred_check
          %p271 = pneg %p92
        $region18: #{tpu_custom_call.1} parent=11 // pred_check_branch
          %273 = sbr.rel (%p271) target = $region20
        $region19: #{tpu_custom_call.1} parent=11 // pred_region
          %s274 = smul.u32 2, %s27
          %p275 = scmp.lt.s32.totalorder %s274, 1
          %s276 = scalar_select %p275, %s274, 1
          %p277 = scmp.lt.s32.totalorder %s29, 0
          %s278 = scalar_select %p277, %s29, 0
          %s279 = sadd.s32 %s278, %s276
          %s280 = smul.addr %s279, 8
          %s281 = scalar_lea.vmem %s1, %s280
          %s282 = smul.u32 2, %s27
        $region20: #{tpu_custom_call.1} parent=11 // pred_fallthru
          _
        // Predicated region
        $region21: #{tpu_custom_call.1} parent=11 // pred_check
          %p283 = pneg %p113
        $region22: #{tpu_custom_call.1} parent=11 // pred_check_branch
          %285 = sbr.rel (%p283) target = $region24
        $region23: #{tpu_custom_call.1} parent=11 // pred_region
          %287 = vsyncadd [#allocation4], 0
          %s289 = sshll.u32 %s2, 4
          %s290 = int_to_ptr.hbm [resolvable:$true] %s289
          %s291 = sshll.u32 [#allocation3], 4
          %s292 = int_to_ptr.vmem [resolvable:$true] %s291
          %294 = dma.hbm_to_vmem [thread:$0]  %s290, 128, %s292, [#allocation4]
        $region24: #{tpu_custom_call.1} parent=11 // pred_fallthru
          _
        // Predicated region
        $region25: #{tpu_custom_call.1} parent=11 // pred_check
          %p295 = pneg %p134
        $region26: #{tpu_custom_call.1} parent=11 // pred_check_branch
          %297 = sbr.rel (%p295) target = $region28
        $region27: #{tpu_custom_call.1} parent=11 // pred_region
          %299 = vsyncadd [#allocation7], 0
          %s301 = sshll.u32 %s3, 4
          %s302 = int_to_ptr.hbm [resolvable:$true] %s301
          %s303 = sshll.u32 [#allocation6], 4
          %s304 = int_to_ptr.vmem [resolvable:$true] %s303
          %306 = dma.hbm_to_vmem [thread:$0]  %s302, 64, %s304, [#allocation7]
        $region28: #{tpu_custom_call.1} parent=11 // pred_fallthru
          _
        // Predicated region
        $region29: #{tpu_custom_call.1} parent=11 // pred_check
          %p307 = pneg %p155
        $region30: #{tpu_custom_call.1} parent=11 // pred_check_branch
          %309 = sbr.rel (%p307) target = $region32
        $region31: #{tpu_custom_call.1} parent=11 // pred_region
          _
        $region32: #{tpu_custom_call.1} parent=11 // pred_fallthru
          _
        // Predicated region
        $region33: #{tpu_custom_call.1} parent=11 // pred_check
          %p310 = pneg %p176
        $region34: #{tpu_custom_call.1} parent=11 // pred_check_branch
          %312 = sbr.rel (%p310) target = $region36
        $region35: #{tpu_custom_call.1} parent=11 // pred_region
          _
        $region36: #{tpu_custom_call.1} parent=11 // pred_fallthru
          _
        // Predicated region
        $region37: #{tpu_custom_call.1} parent=11 // pred_check
          %p313 = pneg %p197
        $region38: #{tpu_custom_call.1} parent=11 // pred_check_branch
          %315 = sbr.rel (%p313) target = $region40
        $region39: #{tpu_custom_call.1} parent=11 // pred_region
          _
        $region40: #{tpu_custom_call.1} parent=11 // pred_fallthru
          _
        // Predicated region
        $region41: #{tpu_custom_call.1} parent=11 // pred_check
          %p316 = pneg %p218
        $region42: #{tpu_custom_call.1} parent=11 // pred_check_branch
          %318 = sbr.rel (%p316) target = $region44
        $region43: #{tpu_custom_call.1} parent=11 // pred_region
          _
        $region44: #{tpu_custom_call.1} parent=11 // pred_fallthru
          _
      $region12: #{tpu_custom_call.1} parent=5 // pred_fallthru
        _
      %p319 = scmp.lt.s32.totalorder %s17, 2
      // Predicated region
      $region45: #{tpu_custom_call.1} parent=5 // pred_check
        %p320 = pneg %p319
      $region46: #{tpu_custom_call.1} parent=5 // pred_check_branch
        %322 = sbr.rel (%p320) target = $region48
      $region47: #{tpu_custom_call.1} parent=5 // pred_region
        _
      $region48: #{tpu_custom_call.1} parent=5 // pred_fallthru
        _
      %p323 = scmp.le.s32.totalorder 1, %s17
      %p324 = scmp.lt.s32.totalorder %s17, 3
      %p325 = pnand %p323, %p324
      %p326 = pneg %p325
      // Predicated region
      $region49: #{tpu_custom_call.1} parent=5 // pred_check
        _
      $region50: #{tpu_custom_call.1} parent=5 // pred_check_branch
        %328 = sbr.rel (%p325) target = $region52
      $region51: #{tpu_custom_call.1} parent=5 // pred_region
        %s329 = ssub.s32 %s17, 1
        // Predicated region
        $region53: #{tpu_custom_call.1} parent=51 // pred_check
          %p330 = pneg %p113
        $region54: #{tpu_custom_call.1} parent=51 // pred_check_branch
          %332 = sbr.rel (%p330) target = $region56
        $region55: #{tpu_custom_call.1} parent=51 // pred_region
          %334 = dma.done [#allocation4], 128
        $region56: #{tpu_custom_call.1} parent=51 // pred_fallthru
          _
        // Predicated region
        $region57: #{tpu_custom_call.1} parent=51 // pred_check
          %p335 = pneg %p134
        $region58: #{tpu_custom_call.1} parent=51 // pred_check_branch
          %337 = sbr.rel (%p335) target = $region60
        $region59: #{tpu_custom_call.1} parent=51 // pred_region
          %339 = dma.done [#allocation7], 64
        $region60: #{tpu_custom_call.1} parent=51 // pred_fallthru
          _
        %s340 = smul.u32 2, %s27
        %p341 = scmp.lt.s32.totalorder %s340, 1
        %s342 = scalar_select %p341, %s340, 1
        %p343 = scmp.lt.s32.totalorder %s29, 0
        %s344 = scalar_select %p343, %s29, 0
        %s345 = sadd.s32 %s344, %s342
        %s346 = smul.addr %s345, 8
        %s347 = scalar_lea.vmem %s0, %s346
        %p348 = pneg %p64
        %p349 = pneg %p61
        %s350 = smul.u32 2, %s27
        %p351 = scmp.lt.s32.totalorder %s350, 1
        %s352 = scalar_select %p351, %s350, 1
        %p353 = scmp.lt.s32.totalorder %s29, 0
        %s354 = scalar_select %p353, %s29, 0
        %s355 = sadd.s32 %s354, %s352
        %s356 = smul.addr %s355, 8
        %s357 = scalar_lea.vmem %s1, %s356
        %p358 = pneg %p92
        %p359 = pneg %p89
        %p360 = pneg %p113
        %p361 = pneg %p110
        %p362 = pneg %p134
        %p363 = pneg %p131
        %p364 = pneg %p155
        %p365 = pneg %p152
        %p366 = pneg %p176
        %p367 = pneg %p173
        %p368 = pneg %p197
        %p369 = pneg %p194
        %p370 = pneg %p218
        %p371 = pneg %p215
        %p372 = pneg %p244
        %p373 = pneg %p241
        %s374 = smul.u32 2, %s27
        %p375 = scmp.lt.s32.totalorder %s374, 1
        %s376 = scalar_select %p375, %s374, 1
        %p377 = scmp.lt.s32.totalorder %s29, 0
        %s378 = scalar_select %p377, %s29, 0
        %s379 = sadd.s32 %s378, %s376
        %s380 = smul.addr %s379, 8
        %s381 = scalar_lea.vmem %s0, %s380
        %s382 = smul.u32 2, %s27
        %s383 = smul.u32 2, %s27
        %p384 = scmp.lt.s32.totalorder %s383, 1
        %s385 = scalar_select %p384, %s383, 1
        %p386 = scmp.lt.s32.totalorder %s29, 0
        %s387 = scalar_select %p386, %s29, 0
        %s388 = sadd.s32 %s387, %s385
        %s389 = smul.addr %s388, 8
        %s390 = scalar_lea.vmem %s1, %s389
        %s391 = smul.u32 2, %s27
        %s392 = smul.u32 2, %s27
        %v393 = vld [vmem:[%s381] sm:$0xff]
        %v394 = vld [vmem:[%s381 + $0x8] sm:$0xff]
        %v395 = vld [vmem:[%s390] sm:$0xff]
        %v396 = vld [vmem:[%s390 + $0x8] sm:$0xff]
        %vm397 = vcmp.gt.f32.partialorder %v395, 0.5
        %vm398 = vcmp.gt.f32.partialorder %v396, 0.5
        %400 = vset.pattern.permute.xlu0 7
        %401 = vperm.xlu0 %400, %v395
        %v402 = vpop.permute.xlu0 %401
        %405 = vset.pattern.permute.xlu0 7
        %406 = vperm.xlu0 %405, %v396
        %v407 = vpop.permute.xlu0 %406
        %v409 = vmul.f32 %v393, %v402
        %v410 = vmul.f32 %v394, %v407
        %p411 = scmp.eq.s32.totalorder %s28, 0
        // Predicated region
        $region61: #{tpu_custom_call.1} parent=51 // pred_check
          %p412 = pneg %p411
        $region62: #{tpu_custom_call.1} parent=51 // pred_check_branch
          %414 = sbr.rel (%p412) target = $region64
        $region63: #{tpu_custom_call.1} parent=51 // pred_region
          %p415 = scmp.eq.s32.totalorder %s29, 0
          // Predicated region
          $region65: #{tpu_custom_call.1} parent=63 // pred_check
            %p416 = pneg %p415
          $region66: #{tpu_custom_call.1} parent=63 // pred_check_branch
            %418 = sbr.rel (%p416) target = $region68
          $region67: #{tpu_custom_call.1} parent=63 // pred_region
            %vm419 = vcmask 253952
            %420 = vst.msk [vmem:[#allocation2] sm:$0x1] %vm419, -inf
            %421 = vst.msk [vmem:[#allocation2 + $0x1] sm:$0x1] %vm419, -inf
          $region68: #{tpu_custom_call.1} parent=63 // pred_fallthru
            _
          %v422 = vsel %vm397, 1, 0
          %v423 = vsel %vm398, 1, 0
          %424 = vset.pattern.permute.xlu0 6
          %425 = vperm.xlu0 %424, %v422
          %v426 = vpop.permute.xlu0 %425
          %427 = vset.pattern.permute.xlu0 6
          %428 = vperm.xlu0 %427, %v423
          %v429 = vpop.permute.xlu0 %428
          %vm430 = vcmp.eq.s32.totalorder %v426, 1
          %vm431 = vcmp.eq.s32.totalorder %v429, 1
          %v432 = vsel %vm430, %v409, -inf
          %v433 = vsel %vm431, %v410, -inf
          %vm434 = vcmask 261120
          %v435 = vsel %vm434, %v432, -inf
          %v436 = vrot.slane %v435, 4
          %v437 = vmax.f32 %v435, %v436
          %v438 = vrot.slane %v437, 2
          %v439 = vmax.f32 %v437, %v438
          %v440 = vrot.slane %v439, 1
          %v441 = vmax.f32 %v439, %v440
          %v442 = vsel %vm434, %v433, -inf
          %v443 = vrot.slane %v442, 4
          %v444 = vmax.f32 %v442, %v443
          %v445 = vrot.slane %v444, 2
          %v446 = vmax.f32 %v444, %v445
          %v447 = vrot.slane %v446, 1
          %v448 = vmax.f32 %v446, %v447
          %v449 = vld [vmem:[#allocation2] sm:$0x1]
          %v450 = vld [vmem:[#allocation2 + $0x1] sm:$0x1]
          %v451 = vmax.f32 %v449, %v441
          %v452 = vmax.f32 %v450, %v448
          %vm453 = vcmask 253952
          %454 = vst.msk [vmem:[#allocation2] sm:$0x1] %vm453, %v451
          %455 = vst.msk [vmem:[#allocation2 + $0x1] sm:$0x1] %vm453, %v452
        $region64: #{tpu_custom_call.1} parent=51 // pred_fallthru
          _
        %p456 = scmp.eq.s32.totalorder %s28, 1
        // Predicated region
        $region69: #{tpu_custom_call.1} parent=51 // pred_check
          %p457 = pneg %p456
        $region70: #{tpu_custom_call.1} parent=51 // pred_check_branch
          %459 = sbr.rel (%p457) target = $region72
        $region71: #{tpu_custom_call.1} parent=51 // pred_region
          %v460 = vld [vmem:[#allocation3] sm:$0xff]
          %v461 = vld [vmem:[#allocation6] sm:$0xf]
          %v462 = vld [vmem:[%s4] sm:$0xff]
          %v463 = vld [vmem:[%s4 + $0x8] sm:$0xff]
          %v464 = vld [vmem:[%s4 + $0x10] sm:$0xff]
          %v465 = vld [vmem:[%s4 + $0x18] sm:$0xff]
          %v466 = vld [vmem:[%s4 + $0x20] sm:$0xff]
          %v467 = vld [vmem:[%s4 + $0x28] sm:$0xff]
          %v468 = vld [vmem:[%s4 + $0x30] sm:$0xff]
          %v469 = vld [vmem:[%s4 + $0x38] sm:$0xff]
          %vm470 = vcmask 261120
          %v471 = vsel %vm470, %v409, 0.0
          %472 = vadd.xlane.f32.xlu0 %v471
          %v473 = vpop.xlane.xlu0 %472
          %v474 = vsel %vm470, %v410, 0.0
          %475 = vadd.xlane.f32.xlu0 %v474
          %v476 = vpop.xlane.xlu0 %475
          %v477 = vrcp.pop 32.0
          %v478 = vmul.f32 32.0, %v477
          %v479 = vsub.f32 1.0, %v478
          %v480 = vmul.f32 %v477, %v479
          %v481 = vadd.f32 %v477, %v480
          %vm482 = vweird.f32 %v477
          %v483 = vsel %vm482, %v477, %v481
          %v484 = vmul.f32 %v473, %v483
          %v485 = vmul.f32 %v476, %v483
          %v486 = vmul.f32 %v409, %v409
          %v487 = vmul.f32 %v410, %v410
          %v488 = vsel %vm470, %v486, 0.0
          %489 = vadd.xlane.f32.xlu0 %v488
          %v490 = vpop.xlane.xlu0 %489
          %v491 = vsel %vm470, %v487, 0.0
          %492 = vadd.xlane.f32.xlu0 %v491
          %v493 = vpop.xlane.xlu0 %492
          %v494 = vmul.f32 %v490, %v483
          %v495 = vmul.f32 %v493, %v483
          %v496 = vmul.f32 %v484, %v484
          %v497 = vmul.f32 %v485, %v485
          %v498 = vsub.f32 %v494, %v496
          %v499 = vsub.f32 %v495, %v497
          %v500 = vsub.f32 %v409, %v484
          %v501 = vsub.f32 %v410, %v485
          %v502 = vadd.f32 %v498, 1e-05
          %v503 = vadd.f32 %v499, 1e-05
          %v504 = vrsqrt.pop %v502
          %v505 = vmul.f32 %v504, %v502
          %v506 = vmul.f32 %v505, %v504
          %v507 = vmul.f32 0.5, %v506
          %v508 = vsub.f32 1.5, %v507
          %v509 = vmul.f32 %v504, %v508
          %vm510 = vweird.f32 %v502
          %vm511 = vweird.f32 %v504
          %vm512 = vmor %vm510, %vm511
          %v513 = vsel %vm512, %v504, %v509
          %v514 = vrsqrt.pop %v503
          %v515 = vmul.f32 %v514, %v503
          %v516 = vmul.f32 %v515, %v514
          %v517 = vmul.f32 0.5, %v516
          %v518 = vsub.f32 1.5, %v517
          %v519 = vmul.f32 %v514, %v518
          %vm520 = vweird.f32 %v503
          %vm521 = vweird.f32 %v514
          %vm522 = vmor %vm520, %vm521
          %v523 = vsel %vm522, %v514, %v519
          %v524 = vmul.f32 %v500, %v513
          %v525 = vmul.f32 %v501, %v523
          %v526 = vperm.slane %v460, 0
          %v527 = vmul.f32 %v524, %v526
          %v528 = vmul.f32 %v525, %v526
          %v529 = vperm.slane %v460, 1
          %v530 = vadd.f32 %v527, %v529
          %v531 = vadd.f32 %v528, %v529
          %532 = vset.pattern.permute.xlu0 0
          %533 = vperm.xlu0 %532, %v395
          %v534 = vpop.permute.xlu0 %533
          %536 = vset.pattern.permute.xlu0 0
          %537 = vperm.xlu0 %536, %v396
          %v538 = vpop.permute.xlu0 %537
          %v540 = vperm.slane %v461, 0
          %v541 = vmul.f32 %v534, %v540
          %v542 = vmul.f32 %v538, %v540
          %543 = vset.pattern.permute.xlu0 1
          %544 = vperm.xlu0 %543, %v395
          %v545 = vpop.permute.xlu0 %544
          %547 = vset.pattern.permute.xlu0 1
          %548 = vperm.xlu0 %547, %v396
          %v549 = vpop.permute.xlu0 %548
          %v551 = vperm.slane %v461, 1
          %v552 = vmul.f32 %v545, %v551
          %v553 = vmul.f32 %v549, %v551
          %v554 = vadd.f32 %v541, %v552
          %v555 = vadd.f32 %v542, %v553
          %556 = vset.pattern.permute.xlu0 2
          %557 = vperm.xlu0 %556, %v395
          %v558 = vpop.permute.xlu0 %557
          %560 = vset.pattern.permute.xlu0 2
          %561 = vperm.xlu0 %560, %v396
          %v562 = vpop.permute.xlu0 %561
          %v564 = vperm.slane %v461, 2
          %v565 = vmul.f32 %v558, %v564
          %v566 = vmul.f32 %v562, %v564
          %v567 = vadd.f32 %v554, %v565
          %v568 = vadd.f32 %v555, %v566
          %v569 = vperm.slane %v461, 3
          %v570 = vadd.f32 %v567, %v569
          %v571 = vadd.f32 %v568, %v569
          %v572 = vmax.f32 %v570, 0.0
          %v573 = vmax.f32 %v571, 0.0
          %v574 = vperm.slane %v460, 2
          %vm575 = vcmask 523264
          %v577 = vsel %vm575, %v572, 0
          %v580 = vsel %vm575, %v573, 0
          %582 = vmatpush.msra.mxu0 0.0
          %583 = vmatpush.msra.mxu0 0.0
          %584 = vmatpush.msra.mxu0 0.0
          %585 = vmatpush.msra.mxu0 0.0
          %586 = vmatpush.msra.mxu0 0.0
          %587 = vmatpush.msra.mxu0 0.0
          %588 = vmatpush.msra.mxu0 0.0
          %589 = vmatpush.msra.mxu0 0.0
          %590 = vmatpush.msra.mxu0 %v469
          %591 = vmatpush.msra.mxu0 %v468
          %592 = vmatpush.msra.mxu0 %v467
          %593 = vmatpush.msra.mxu0 %v466
          %594 = vmatpush.msra.mxu0 %v465
          %595 = vmatpush.msra.mxu0 %v464
          %596 = vmatpush.msra.mxu0 %v463
          %597 = vmatpush.msra.mxu0 %v462
          %598 = vmatmul.f32.gmra.mxu0 %v577
          %v599 = vpop.f32.mrf.mxu0
          %v600 = vadd.f32 %v574, %v599
          %601 = vmatmul.f32.gmra.mxu0 %v580
          %v602 = vpop.f32.mrf.mxu0
          %v603 = vadd.f32 %v574, %v602
          %604 = vdwg.mxu0
          %v605 = vsel %vm470, %v600, 0.0
          %606 = vadd.xlane.f32.xlu0 %v605
          %v607 = vpop.xlane.xlu0 %606
          %v608 = vsel %vm470, %v603, 0.0
          %609 = vadd.xlane.f32.xlu0 %v608
          %v610 = vpop.xlane.xlu0 %609
          %v611 = vmul.f32 %v607, %v483
          %v612 = vmul.f32 %v610, %v483
          %v613 = vmul.f32 %v600, %v600
          %v614 = vmul.f32 %v603, %v603
          %v615 = vsel %vm470, %v613, 0.0
          %616 = vadd.xlane.f32.xlu0 %v615
          %v617 = vpop.xlane.xlu0 %616
          %v618 = vsel %vm470, %v614, 0.0
          %619 = vadd.xlane.f32.xlu0 %v618
          %v620 = vpop.xlane.xlu0 %619
          %v621 = vmul.f32 %v617, %v483
          %v622 = vmul.f32 %v620, %v483
          %v623 = vmul.f32 %v611, %v611
          %v624 = vmul.f32 %v612, %v612
          %v625 = vsub.f32 %v621, %v623
          %v626 = vsub.f32 %v622, %v624
          %v627 = vsub.f32 %v600, %v611
          %v628 = vsub.f32 %v603, %v612
          %v629 = vadd.f32 %v625, 1e-05
          %v630 = vadd.f32 %v626, 1e-05
          %v631 = vrsqrt.pop %v629
          %v632 = vmul.f32 %v631, %v629
          %v633 = vmul.f32 %v632, %v631
          %v634 = vmul.f32 0.5, %v633
          %v635 = vsub.f32 1.5, %v634
          %v636 = vmul.f32 %v631, %v635
          %vm637 = vweird.f32 %v629
          %vm638 = vweird.f32 %v631
          %vm639 = vmor %vm637, %vm638
          %v640 = vsel %vm639, %v631, %v636
          %v641 = vrsqrt.pop %v630
          %v642 = vmul.f32 %v641, %v630
          %v643 = vmul.f32 %v642, %v641
          %v644 = vmul.f32 0.5, %v643
          %v645 = vsub.f32 1.5, %v644
          %v646 = vmul.f32 %v641, %v645
          %vm647 = vweird.f32 %v630
          %vm648 = vweird.f32 %v641
          %vm649 = vmor %vm647, %vm648
          %v650 = vsel %vm649, %v641, %v646
          %v651 = vmul.f32 %v627, %v640
          %v652 = vmul.f32 %v628, %v650
          %v653 = vperm.slane %v460, 3
          %v654 = vmul.f32 %v651, %v653
          %v655 = vmul.f32 %v652, %v653
          %v656 = vperm.slane %v460, 4
          %v657 = vadd.f32 %v654, %v656
          %v658 = vadd.f32 %v655, %v656
          %659 = vset.pattern.permute.xlu0 3
          %660 = vperm.xlu0 %659, %v395
          %v661 = vpop.permute.xlu0 %660
          %663 = vset.pattern.permute.xlu0 3
          %664 = vperm.xlu0 %663, %v396
          %v665 = vpop.permute.xlu0 %664
          %v667 = vmul.f32 %v661, %v540
          %v668 = vmul.f32 %v665, %v540
          %669 = vset.pattern.permute.xlu0 4
          %670 = vperm.xlu0 %669, %v395
          %v671 = vpop.permute.xlu0 %670
          %673 = vset.pattern.permute.xlu0 4
          %674 = vperm.xlu0 %673, %v396
          %v675 = vpop.permute.xlu0 %674
          %v677 = vmul.f32 %v671, %v551
          %v678 = vmul.f32 %v675, %v551
          %v679 = vadd.f32 %v667, %v677
          %v680 = vadd.f32 %v668, %v678
          %681 = vset.pattern.permute.xlu0 5
          %682 = vperm.xlu0 %681, %v395
          %v683 = vpop.permute.xlu0 %682
          %685 = vset.pattern.permute.xlu0 5
          %686 = vperm.xlu0 %685, %v396
          %v687 = vpop.permute.xlu0 %686
          %v689 = vmul.f32 %v683, %v564
          %v690 = vmul.f32 %v687, %v564
          %v691 = vadd.f32 %v679, %v689
          %v692 = vadd.f32 %v680, %v690
          %v693 = vadd.f32 %v691, %v569
          %v694 = vadd.f32 %v692, %v569
          %v695 = vmax.f32 %v693, 0.0
          %v696 = vmax.f32 %v694, 0.0
          %v698 = vsel %vm575, %v695, 0
          %v701 = vsel %vm575, %v696, 0
          %703 = vmatpush.msra.mxu0 0.0
          %704 = vmatpush.msra.mxu0 0.0
          %705 = vmatpush.msra.mxu0 0.0
          %706 = vmatpush.msra.mxu0 0.0
          %707 = vmatpush.msra.mxu0 0.0
          %708 = vmatpush.msra.mxu0 0.0
          %709 = vmatpush.msra.mxu0 0.0
          %710 = vmatpush.msra.mxu0 0.0
          %711 = vmatpush.msra.mxu0 %v469
          %712 = vmatpush.msra.mxu0 %v468
          %713 = vmatpush.msra.mxu0 %v467
          %714 = vmatpush.msra.mxu0 %v466
          %715 = vmatpush.msra.mxu0 %v465
          %716 = vmatpush.msra.mxu0 %v464
          %717 = vmatpush.msra.mxu0 %v463
          %718 = vmatpush.msra.mxu0 %v462
          %719 = vmatmul.f32.gmra.mxu0 %v698
          %v720 = vpop.f32.mrf.mxu0
          %v721 = vadd.f32 %v574, %v720
          %722 = vmatmul.f32.gmra.mxu0 %v701
          %v723 = vpop.f32.mrf.mxu0
          %v724 = vadd.f32 %v574, %v723
          %725 = vdwg.mxu0
          %v726 = vsel %vm470, %v721, 0.0
          %727 = vadd.xlane.f32.xlu0 %v726
          %v728 = vpop.xlane.xlu0 %727
          %v729 = vsel %vm470, %v724, 0.0
          %730 = vadd.xlane.f32.xlu0 %v729
          %v731 = vpop.xlane.xlu0 %730
          %v732 = vmul.f32 %v728, %v483
          %v733 = vmul.f32 %v731, %v483
          %v734 = vmul.f32 %v721, %v721
          %v735 = vmul.f32 %v724, %v724
          %v736 = vsel %vm470, %v734, 0.0
          %737 = vadd.xlane.f32.xlu0 %v736
          %v738 = vpop.xlane.xlu0 %737
          %v739 = vsel %vm470, %v735, 0.0
          %740 = vadd.xlane.f32.xlu0 %v739
          %v741 = vpop.xlane.xlu0 %740
          %v742 = vmul.f32 %v738, %v483
          %v743 = vmul.f32 %v741, %v483
          %v744 = vmul.f32 %v732, %v732
          %v745 = vmul.f32 %v733, %v733
          %v746 = vsub.f32 %v742, %v744
          %v747 = vsub.f32 %v743, %v745
          %v748 = vsub.f32 %v721, %v732
          %v749 = vsub.f32 %v724, %v733
          %v750 = vadd.f32 %v746, 1e-05
          %v751 = vadd.f32 %v747, 1e-05
          %v752 = vrsqrt.pop %v750
          %v753 = vmul.f32 %v752, %v750
          %v754 = vmul.f32 %v753, %v752
          %v755 = vmul.f32 0.5, %v754
          %v756 = vsub.f32 1.5, %v755
          %v757 = vmul.f32 %v752, %v756
          %vm758 = vweird.f32 %v750
          %vm759 = vweird.f32 %v752
          %vm760 = vmor %vm758, %vm759
          %v761 = vsel %vm760, %v752, %v757
          %v762 = vrsqrt.pop %v751
          %v763 = vmul.f32 %v762, %v751
          %v764 = vmul.f32 %v763, %v762
          %v765 = vmul.f32 0.5, %v764
          %v766 = vsub.f32 1.5, %v765
          %v767 = vmul.f32 %v762, %v766
          %vm768 = vweird.f32 %v751
          %vm769 = vweird.f32 %v762
          %vm770 = vmor %vm768, %vm769
          %v771 = vsel %vm770, %v762, %v767
          %v772 = vmul.f32 %v748, %v761
          %v773 = vmul.f32 %v749, %v771
          %v774 = vmul.f32 %v772, %v653
          %v775 = vmul.f32 %v773, %v653
          %v776 = vadd.f32 %v774, %v656
          %v777 = vadd.f32 %v775, %v656
          %v778 = vadd.f32 %v657, %v776
          %v779 = vadd.f32 %v658, %v777
          %v780 = vld [vmem:[#allocation2] sm:$0x1]
          %v781 = vld [vmem:[#allocation2 + $0x1] sm:$0x1]
          %v784 = vperm.slane %v780, 0
          %v785 = vperm.slane %v781, 0
          %v788 = vadd.f32 %v778, %v784
          %v789 = vadd.f32 %v779, %v785
          %v790 = vld [vmem:[%s5] sm:$0xff]
          %v791 = vld [vmem:[%s5 + $0x8] sm:$0xff]
          %v792 = vld [vmem:[%s5 + $0x10] sm:$0xff]
          %v793 = vld [vmem:[%s5 + $0x18] sm:$0xff]
          %v794 = vld [vmem:[%s6] sm:$0xff]
          %v795 = vld [vmem:[%s6 + $0x8] sm:$0xff]
          %v796 = vld [vmem:[%s6 + $0x10] sm:$0xff]
          %v797 = vld [vmem:[%s6 + $0x18] sm:$0xff]
          %v799 = vsel %vm470, %v788, 0
          %v802 = vsel %vm470, %v789, 0
          %804 = vmatpush.msra.mxu0 0.0
          %805 = vmatpush.msra.mxu0 0.0
          %806 = vmatpush.msra.mxu0 0.0
          %807 = vmatpush.msra.mxu0 0.0
          %808 = vmatpush.msra.mxu0 0.0
          %809 = vmatpush.msra.mxu0 0.0
          %810 = vmatpush.msra.mxu0 0.0
          %811 = vmatpush.msra.mxu0 0.0
          %812 = vmatpush.msra.mxu0 0.0
          %813 = vmatpush.msra.mxu0 0.0
          %814 = vmatpush.msra.mxu0 0.0
          %815 = vmatpush.msra.mxu0 0.0
          %816 = vmatpush.msra.mxu0 %v797
          %817 = vmatpush.msra.mxu0 %v796
          %818 = vmatpush.msra.mxu0 %v795
          %819 = vmatpush.msra.mxu0 %v794
          %820 = vmatmul.f32.gmra.mxu0 %v799
          %v821 = vpop.f32.mrf.mxu0
          %v822 = vadd.f32 0.0, %v821
          %823 = vmatmul.f32.gmra.mxu0 %v802
          %v824 = vpop.f32.mrf.mxu0
          %v825 = vadd.f32 0.0, %v824
          %826 = vdwg.mxu0
          %v828 = vsel %vm470, %v530, 0
          %v831 = vsel %vm470, %v531, 0
          %833 = vmatpush.msra.mxu0 0.0
          %834 = vmatpush.msra.mxu0 0.0
          %835 = vmatpush.msra.mxu0 0.0
          %836 = vmatpush.msra.mxu0 0.0
          %837 = vmatpush.msra.mxu0 0.0
          %838 = vmatpush.msra.mxu0 0.0
          %839 = vmatpush.msra.mxu0 0.0
          %840 = vmatpush.msra.mxu0 0.0
          %841 = vmatpush.msra.mxu0 0.0
          %842 = vmatpush.msra.mxu0 0.0
          %843 = vmatpush.msra.mxu0 0.0
          %844 = vmatpush.msra.mxu0 0.0
          %845 = vmatpush.msra.mxu0 %v793
          %846 = vmatpush.msra.mxu0 %v792
          %847 = vmatpush.msra.mxu0 %v791
          %848 = vmatpush.msra.mxu0 %v790
          %849 = vmatmul.f32.gmra.mxu0 %v828
          %v850 = vpop.f32.mrf.mxu0
          %v851 = vadd.f32 %v822, %v850
          %852 = vmatmul.f32.gmra.mxu0 %v831
          %v853 = vpop.f32.mrf.mxu0
          %v854 = vadd.f32 %v825, %v853
          %855 = vdwg.mxu0
          %v856 = vld [vmem:[%s7] sm:$0x1]
          %v858 = vperm.slane %v856, 0
          %v860 = vadd.f32 %v851, %v858
          %v861 = vadd.f32 %v854, %v858
          %v862 = vmul.f32 %v860, %v530
          %v863 = vmul.f32 %v861, %v531
          %866 = vrot.lane.b32.xlu0 %v860, 96
          %v867 = vpop.permute.xlu0 %866
          %868 = vrot.lane.b32.xlu0 %v861, 96
          %v869 = vpop.permute.xlu0 %868
          %v872 = vadd.f32 %v862, %v867
          %v873 = vadd.f32 %v863, %v869
          %v874 = vsel %vm397, 1, 0
          %v875 = vsel %vm398, 1, 0
          %876 = vset.pattern.permute.xlu0 6
          %877 = vperm.xlu0 %876, %v874
          %v878 = vpop.permute.xlu0 %877
          %879 = vset.pattern.permute.xlu0 6
          %880 = vperm.xlu0 %879, %v875
          %v881 = vpop.permute.xlu0 %880
          %vm882 = vcmp.eq.s32.totalorder %v878, 1
          %vm883 = vcmp.eq.s32.totalorder %v881, 1
          %v884 = vsel %vm882, %v872, -inf
          %v885 = vsel %vm883, %v873, -inf
          %v886 = vsel %vm470, %v884, -inf
          %v887 = vrot.slane %v886, 4
          %v888 = vmax.f32 %v886, %v887
          %v889 = vrot.slane %v888, 2
          %v890 = vmax.f32 %v888, %v889
          %v891 = vrot.slane %v890, 1
          %v892 = vmax.f32 %v890, %v891
          %v893 = vsel %vm470, %v885, -inf
          %v894 = vrot.slane %v893, 4
          %v895 = vmax.f32 %v893, %v894
          %v896 = vrot.slane %v895, 2
          %v897 = vmax.f32 %v895, %v896
          %v898 = vrot.slane %v897, 1
          %v899 = vmax.f32 %v897, %v898
          %p900 = scmp.eq.s32.totalorder %s29, 0
          // Predicated region
          $region73: #{tpu_custom_call.1} parent=71 // pred_check
            %p901 = pneg %p900
          $region74: #{tpu_custom_call.1} parent=71 // pred_check_branch
            %903 = sbr.rel (%p901) target = $region76
          $region75: #{tpu_custom_call.1} parent=71 // pred_region
            %vm904 = vcmask 253952
            %905 = vst.msk [vmem:[#allocation8] sm:$0x1] %vm904, %v892
            %906 = vst.msk [vmem:[#allocation8 + $0x1] sm:$0x1] %vm904, %v899
          $region76: #{tpu_custom_call.1} parent=71 // pred_fallthru
            _
          %p907 = scmp.ne.s32.totalorder %s29, 0
          // Predicated region
          $region77: #{tpu_custom_call.1} parent=71 // pred_check
            %p908 = pneg %p907
          $region78: #{tpu_custom_call.1} parent=71 // pred_check_branch
            %910 = sbr.rel (%p908) target = $region80
          $region79: #{tpu_custom_call.1} parent=71 // pred_region
            %v911 = vld [vmem:[#allocation8] sm:$0x1]
            %v912 = vld [vmem:[#allocation8 + $0x1] sm:$0x1]
            %v913 = vmax.f32 %v911, %v892
            %v914 = vmax.f32 %v912, %v899
            %vm915 = vcmask 253952
            %916 = vst.msk [vmem:[#allocation8] sm:$0x1] %vm915, %v913
            %917 = vst.msk [vmem:[#allocation8 + $0x1] sm:$0x1] %vm915, %v914
          $region80: #{tpu_custom_call.1} parent=71 // pred_fallthru
            _
        $region72: #{tpu_custom_call.1} parent=51 // pred_fallthru
          _
        // Predicated region
        $region81: #{tpu_custom_call.1} parent=51 // pred_check
          %p918 = pneg %p241
        $region82: #{tpu_custom_call.1} parent=51 // pred_check_branch
          %920 = sbr.rel (%p918) target = $region84
        $region83: #{tpu_custom_call.1} parent=51 // pred_region
          %s921 = smul.u32 2, %s27
          %923 = vsyncadd [#allocation5], 0
          %s924 = scalar_lea.hbm %s8, %s921
          %s925 = sshll.u32 [#allocation8], 4
          %s926 = int_to_ptr.vmem [resolvable:$true] %s925
          %s927 = sshll.u32 %s924, 4
          %s928 = int_to_ptr.hbm [resolvable:$true] %s927
          %933 = dma.vmem_to_hbm [thread:$0]  %s926, 32, %s928, [#allocation5], 16, 16, 1
        $region84: #{tpu_custom_call.1} parent=51 // pred_fallthru
          _
        // Predicated region
        $region85: #{tpu_custom_call.1} parent=51 // pred_check
          %p934 = pneg %p241
        $region86: #{tpu_custom_call.1} parent=51 // pred_check_branch
          %936 = sbr.rel (%p934) target = $region88
        $region87: #{tpu_custom_call.1} parent=51 // pred_region
          %938 = dma.done [#allocation5], 32
        $region88: #{tpu_custom_call.1} parent=51 // pred_fallthru
          _
      $region52: #{tpu_custom_call.1} parent=5 // pred_fallthru
        _
      %p939 = scmp.le.s32.totalorder 2, %s17
      // Predicated region
      $region89: #{tpu_custom_call.1} parent=5 // pred_check
        %p940 = pneg %p939
      $region90: #{tpu_custom_call.1} parent=5 // pred_check_branch
        %942 = sbr.rel (%p940) target = $region92
      $region91: #{tpu_custom_call.1} parent=5 // pred_region
        %s943 = ssub.s32 %s17, 2
      $region92: #{tpu_custom_call.1} parent=5 // pred_fallthru
        _
    $region6: #{tpu_custom_call.1} parent=1 // loop_footer
      %s21 = sadd.s32 1, %s17
    $region7: #{tpu_custom_call.1} parent=1 // loop_footer_branch
      %16 = sbr.rel target = $region3
    $region8: #{tpu_custom_call.1} parent=1 // loop_exit
      _
    %944 = vsyncpa [#allocation4], 1
    %s945 = scalar_lea.sflag [#allocation4], 1
    %946 = vsyncpa %s945, 1
    %947 = vsyncpa [#allocation7], 1
    %948 = vsyncpa [#allocation5], 1
    %s949 = scalar_lea.sflag [#allocation5], 1
    %950 = vsyncpa %s949, 1

</llo_original>
